<compile_context>
chip_gen: v7x
topology: tpu7x:2x2x1
jax: 0.10.0
libtpu: 0.0.40
codegen_flags: <defaults>
</compile_context>

<pallas_src>
import jax
import jax.numpy as jnp
from jax.experimental import pallas as pl
from jax.experimental.pallas import tpu as pltpu

EPS = 1e-5  # PyTorch BatchNorm2d default eps


def _round_up(x, m):
    return ((x + m - 1) // m) * m


# ------------------------------ Pallas kernels ------------------------------

def linear_kernel(z_ref, w_ref, b_ref, o_ref):
    # z: (B, Din) bf16, w: (Din, Dout) bf16 (pre-transposed), b: (1, Dout) f32
    o_ref[...] = (jnp.dot(z_ref[...], w_ref[...],
                          preferred_element_type=jnp.float32) + b_ref[...])


def convt_stats_kernel(xt_ref, xb_ref, w_ref, y_ref, s_ref):
    # One padded input row per grid step (grid = (B, H_in)):
    #   xt_ref: (1, 1, W+1, Cin) bf16  -- padded input row y
    #   xb_ref: (1, 1, W+1, Cin) bf16  -- padded input row y+1
    #   w_ref : (4, Cin, Np) bf16      -- per-tap sub-pixel phase weights,
    #                                     Np = 4*Cout padded to 128 lanes
    #   y_ref : (1, 1, W, Np) bf16     -- raw ConvT output (pre-BN), 4 phase
    #                                     column groups, lane-dense store
    #   s_ref : (1, 2, Np) f32         -- per-image [sum; sumsq], accumulated
    #                                     across the (arbitrary) row axis
    w_out = y_ref.shape[2]
    xt = xt_ref[0, 0]                              # (W+1, Cin)
    xb = xb_ref[0, 0]
    acc = jnp.dot(xt[:w_out, :], w_ref[0], preferred_element_type=jnp.float32)
    acc = acc + jnp.dot(xt[1:, :], w_ref[1], preferred_element_type=jnp.float32)
    acc = acc + jnp.dot(xb[:w_out, :], w_ref[2], preferred_element_type=jnp.float32)
    acc = acc + jnp.dot(xb[1:, :], w_ref[3], preferred_element_type=jnp.float32)
    y_ref[0, 0] = acc.astype(y_ref.dtype)          # bf16 writeback of y

    @pl.when(pl.program_id(1) == 0)
    def _init():
        s_ref[...] = jnp.zeros_like(s_ref)

    # f32 stats straight from the MXU accumulator; plain row read-modify-writes.
    s_ref[0, 0:1, :] = s_ref[0, 0:1, :] + jnp.sum(acc, axis=0, keepdims=True)
    s_ref[0, 1:2, :] = s_ref[0, 1:2, :] + jnp.sum(acc * acc, axis=0, keepdims=True)


def final_conv_tanh_kernel(x0_ref, x1_ref, x2_ref, w_ref, b_ref, o_ref):
    # Conv2d(C -> 1, k3, p1) + Tanh; one output row per grid step.
    #   xk_ref: (1, 1, C, W+2) bf16 -- padded row y+k, channels on sublanes,
    #                                  width on lanes
    #   w_ref : (3, 3, C, 1) f32    -- tap weights as lane-broadcast columns
    #   b_ref : (1, 1) f32
    #   o_ref : (1, 1, 1, W) f32    -- lane-dense output row
    wf = o_ref.shape[3]
    rows = (x0_ref[0, 0].astype(jnp.float32),
            x1_ref[0, 0].astype(jnp.float32),
            x2_ref[0, 0].astype(jnp.float32))      # each (C, W+2)
    c = rows[0].shape[0]
    acc = jnp.zeros((c, wf), jnp.float32)
    for dy in range(3):
        for dx in range(3):
            acc = acc + rows[dy][:, dx:dx + wf] * w_ref[dy, dx]
    out = jnp.sum(acc, axis=0, keepdims=True) + b_ref[...]   # (1, W) lane vector
    o_ref[0, 0] = jnp.tanh(out)


# ---------------------------- pallas_call wrappers ---------------------------

def _linear(z_bf, w_t_bf, b_row):
    bsz, dout = z_bf.shape[0], w_t_bf.shape[1]
    return pl.pallas_call(
        linear_kernel,
        out_shape=jax.ShapeDtypeStruct((bsz, dout), jnp.float32),
        in_specs=[pl.BlockSpec(memory_space=pltpu.MemorySpace.VMEM)] * 3,
        out_specs=pl.BlockSpec(memory_space=pltpu.MemorySpace.VMEM),
    )(z_bf, w_t_bf, b_row)


def _convt_stats(a_pad, w4):
    # a_pad: (B, H+1, W+1, Cin) bf16 (post-activation, zero pad on bottom/right)
    bsz, hp, wp, cin = a_pad.shape
    h, w = hp - 1, wp - 1
    np_ = w4.shape[2]
    return pl.pallas_call(
        convt_stats_kernel,
        out_shape=(jax.ShapeDtypeStruct((bsz, h, w, np_), jnp.bfloat16),
                   jax.ShapeDtypeStruct((bsz, 2, np_), jnp.float32)),
        grid=(bsz, h),
        in_specs=[
            pl.BlockSpec((1, 1, wp, cin), lambda b, y: (b, y, 0, 0)),      # row y
            pl.BlockSpec((1, 1, wp, cin), lambda b, y: (b, y + 1, 0, 0)),  # row y+1
            pl.BlockSpec((4, cin, np_), lambda b, y: (0, 0, 0)),           # resident
        ],
        out_specs=(
            pl.BlockSpec((1, 1, w, np_), lambda b, y: (b, y, 0, 0)),
            pl.BlockSpec((1, 2, np_), lambda b, y: (b, 0, 0)),             # accumulator
        ),
        compiler_params=pltpu.CompilerParams(
            dimension_semantics=("parallel", "arbitrary")),
    )(a_pad, a_pad, w4)


def _final_conv_tanh(a_cw, w9, b11):
    # a_cw: (B, H+2, C, W+2) bf16 (post-activation, 1-pixel border, channel-major rows)
    bsz, hp, c, wp = a_cw.shape
    h, w = hp - 2, wp - 2
    return pl.pallas_call(
        final_conv_tanh_kernel,
        out_shape=jax.ShapeDtypeStruct((bsz, h, 1, w), jnp.float32),
        grid=(bsz, h),
        in_specs=[
            pl.BlockSpec((1, 1, c, wp), lambda b, y: (b, y, 0, 0)),
            pl.BlockSpec((1, 1, c, wp), lambda b, y: (b, y + 1, 0, 0)),
            pl.BlockSpec((1, 1, c, wp), lambda b, y: (b, y + 2, 0, 0)),
            pl.BlockSpec((3, 3, c, 1), lambda b, y: (0, 0, 0, 0)),
            pl.BlockSpec((1, 1), lambda b, y: (0, 0)),
        ],
        out_specs=pl.BlockSpec((1, 1, 1, w), lambda b, y: (b, y, 0, 0)),
        compiler_params=pltpu.CompilerParams(
            dimension_semantics=("parallel", "parallel")),
    )(a_cw, a_cw, a_cw, w9, b11)


# ------------------------------- XLA glue -----------------------------------

def _phase_weights(wt, n_pad):
    """ConvTranspose2d weight (Cin, Cout, 3, 3) -> (4, Cin, n_pad) bf16.
    First axis = input taps [a(y,x), a(y,x+1), a(y+1,x), a(y+1,x+1)];
    column groups = output phases (py,px) in order (0,0),(0,1),(1,0),(1,1)."""
    cin, cout = wt.shape[0], wt.shape[1]
    g = lambda ky, kx: wt[:, :, ky, kx]            # (Cin, Cout)
    z = jnp.zeros((cin, cout), wt.dtype)
    w0 = jnp.concatenate([g(1, 1), g(1, 2), g(2, 1), g(2, 2)], axis=1)  # a(y,  x)
    w1 = jnp.concatenate([z,       g(1, 0), z,       g(2, 0)], axis=1)  # a(y,  x+1)
    w2 = jnp.concatenate([z,       z,       g(0, 1), g(0, 2)], axis=1)  # a(y+1,x)
    w3 = jnp.concatenate([z,       z,       z,       g(0, 0)], axis=1)  # a(y+1,x+1)
    w = jnp.stack([w0, w1, w2, w3], axis=0)        # (4, Cin, 4*Cout)
    if n_pad > 4 * cout:
        w = jnp.pad(w, ((0, 0), (0, 0), (0, n_pad - 4 * cout)))
    return w.astype(jnp.bfloat16)


def _fold_bn(stats, cout, count, gamma, beta):
    """Reduce per-image stats and fold BN (train mode, batch stats) into scale/shift.
    Single-pass E[x^2]-E[x]^2 with f32 sums is adequate at these magnitudes."""
    n_real = 4 * cout
    tot = jnp.sum(stats, axis=0)                             # (2, Np)
    mean = jnp.sum(tot[0, :n_real].reshape(4, cout), axis=0) / count
    ex2 = jnp.sum(tot[1, :n_real].reshape(4, cout), axis=0) / count
    var = jnp.maximum(ex2 - mean * mean, 0.0)                # biased variance
    scale = gamma * jax.lax.rsqrt(var + EPS)
    shift = beta - mean * scale
    return scale, shift


def _bn_relu_shuffle(y, scale, shift, cout):
    """BN affine + ReLU + sub-pixel shuffle: (B,H,W,Np) raw -> (B,2H,2W,Cout).
    One XLA elementwise/layout fusion (1 read + 1 write of the activation)."""
    bsz, h, w, _ = y.shape
    n_real = 4 * cout
    scale4 = jnp.tile(scale, 4)
    shift4 = jnp.tile(shift, 4)
    act = jnp.maximum(y[..., :n_real].astype(jnp.float32) * scale4 + shift4, 0.0)
    act = act.reshape(bsz, h, w, 2, 2, cout)
    act = jnp.transpose(act, (0, 1, 3, 2, 4, 5)).reshape(bsz, 2 * h, 2 * w, cout)
    return act


# --------------------------------- Decoder ----------------------------------

class PallasDecoder:
    def __init__(self, hidden_dim, conv_dims, key):
        conv_dims = list(reversed(conv_dims))     # mirrors conv_dims.reverse()
        self.hidden_dim = hidden_dim
        self.conv_dims = conv_dims
        num_layers = len(conv_dims)
        keys = iter(jax.random.split(key, 2 + 2 * (num_layers - 1) + 4))

        def uni(k, shape, fan_in):
            bound = float(fan_in) ** -0.5
            return jax.random.uniform(k, shape, jnp.float32, -bound, bound)

        c0 = conv_dims[0]
        lin_w = uni(next(keys), (c0 * 4, hidden_dim), hidden_dim)  # (Dout, Din)
        self.lin_wT_bf = lin_w.T.astype(jnp.bfloat16)
        self.lin_b = uni(next(keys), (c0 * 4,), hidden_dim)
        self.lin_b_row = self.lin_b.reshape(1, -1)

        def make_block(cin, cout, kw, kb):
            np_ = _round_up(4 * cout, 128)
            wt = uni(kw, (cin, cout, 3, 3), cout * 9)
            bt = uni(kb, (cout,), cout * 9)   # cancelled by BN mean subtraction
            return dict(wt=wt, bt=bt, w4=_phase_weights(wt, np_),
                        gamma=jnp.ones((cout,), jnp.float32),
                        beta=jnp.zeros((cout,), jnp.float32),
                        cin=cin, cout=cout, np=np_)

        self.blocks = [make_block(conv_dims[i], conv_dims[i + 1],
                                  next(keys), next(keys))
                       for i in range(num_layers - 1)]
        clast = conv_dims[-1]
        self.final_block = make_block(clast, clast, next(keys), next(keys))

        out_w = uni(next(keys), (1, clast, 3, 3), clast * 9)
        self.out_w = out_w                                       # reference layout
        self.out_w9 = jnp.transpose(out_w[0], (1, 2, 0))[:, :, :, None]  # (3,3,C,1)
        self.out_b = uni(next(keys), (1,), clast * 9)
        self.out_b11 = self.out_b.reshape(1, 1)

    # ----------------------------- Pallas forward ----------------------------
    def __call__(self, z):
        bsz = z.shape[0]
        c0 = self.conv_dims[0]
        # input_layer(z).view(-1, c0, 2, 2) (NCHW) -> NHWC working layout.
        lin = _linear(z.astype(jnp.bfloat16), self.lin_wT_bf, self.lin_b_row)
        act = lin.reshape(bsz, c0, 2, 2).transpose(0, 2, 3, 1)   # (B, 2, 2, c0) f32

        for blk in self.blocks + [self.final_block]:
            b_, h, w, _ = act.shape
            a_pad = jnp.pad(act, ((0, 0), (0, 1), (0, 1), (0, 0))).astype(jnp.bfloat16)
            y, stats = _convt_stats(a_pad, blk['w4'])
            scale, shift = _fold_bn(stats, blk['cout'], 4.0 * b_ * h * w,
                                    blk['gamma'], blk['beta'])
            act = _bn_relu_shuffle(y, scale, shift, blk['cout'])  # (B, 2H, 2W, Cout)

        # Final Conv2d(Clast -> 1, k3, p1) + Tanh: channel-major rows, width on lanes.
        a_p = jnp.pad(act, ((0, 0), (1, 1), (1, 1), (0, 0)))
        a_cw = jnp.transpose(a_p, (0, 1, 3, 2)).astype(jnp.bfloat16)  # (B, H+2, C, W+2)
        o = _final_conv_tanh(a_cw, self.out_w9, self.out_b11)         # (B, H, 1, W)
        return jnp.transpose(o, (0, 2, 1, 3))                         # NCHW (B,1,H,W)
        # TODO(synk): BatchNorm running_mean/running_var updates (training-time
        # side effect) are not modeled; normalization uses batch stats (.train()).

    # ----------------------- pure-JAX reference forward ----------------------
    def reference(self, z):
        """Reference Decoder forward (train-mode BN) via XLA convolutions, using
        the same bf16-rounded weights as the Pallas path."""
        f32 = jnp.float32
        zr = z.astype(jnp.bfloat16).astype(f32)
        x = zr @ self.lin_wT_bf.astype(f32) + self.lin_b
        bsz, c0 = z.shape[0], self.conv_dims[0]
        x = x.reshape(bsz, c0, 2, 2)                                  # NCHW
        for blk in self.blocks + [self.final_block]:
            w = blk['wt'].astype(jnp.bfloat16).astype(f32)            # (Cin,Cout,3,3)
            w_dir = jnp.transpose(w[:, :, ::-1, ::-1], (1, 0, 2, 3))  # OIHW, flipped
            x = jax.lax.conv_general_dilated(
                x, w_dir, window_strides=(1, 1), padding=((1, 2), (1, 2)),
                lhs_dilation=(2, 2),
                dimension_numbers=('NCHW', 'OIHW', 'NCHW'))
            x = x + blk['bt'].reshape(1, -1, 1, 1)
            mean = jnp.mean(x, axis=(0, 2, 3), keepdims=True)
            var = jnp.mean(jnp.square(x - mean), axis=(0, 2, 3), keepdims=True)
            x = (x - mean) * jax.lax.rsqrt(var + EPS)
            x = x * blk['gamma'].reshape(1, -1, 1, 1) + blk['beta'].reshape(1, -1, 1, 1)
            x = jnp.maximum(x, 0.0)
        x = jax.lax.conv_general_dilated(
            x, self.out_w, window_strides=(1, 1), padding=((1, 1), (1, 1)),
            dimension_numbers=('NCHW', 'OIHW', 'NCHW'))
        x = x + self.out_b.reshape(1, 1, 1, 1)
        return jnp.tanh(x)


if __name__ == "__main__":
    key = jax.random.PRNGKey(0)
    pkey, zkey = jax.random.split(key)
    hidden_dim = 32
    conv_dims = [8, 16]          # reversed inside -> [16, 8]; output spatial = 8x8
    dec = PallasDecoder(hidden_dim, conv_dims, pkey)
    z = jax.random.normal(zkey, (2, hidden_dim), jnp.float32)

    fwd = jax.jit(lambda latent: dec(latent))
    ref_fn = jax.jit(lambda latent: dec.reference(latent))

    out = jax.block_until_ready(fwd(z))
    ref = jax.block_until_ready(ref_fn(z))

    assert out.shape == (2, 1, 8, 8), out.shape
    assert ref.shape == out.shape, (ref.shape, out.shape)
    assert bool(jnp.all(jnp.isfinite(out)))
    max_err = float(jnp.max(jnp.abs(out - ref)))
    assert max_err < 0.1, f"max abs error vs reference: {max_err}"
    print("KERNEL_OK")
</pallas_src>

<mosaic_0001>
module attributes {stable_mosaic.version = 11 : i64} {
  func.func @linear_kernel(%arg0: memref<2x32xbf16, #tpu.memory_space<vmem>>, %arg1: memref<32x64xbf16, #tpu.memory_space<vmem>>, %arg2: memref<1x64xf32, #tpu.memory_space<vmem>>, %arg3: memref<2x64xf32, #tpu.memory_space<vmem>>) attributes {dimension_semantics = [], scalar_prefetch = 0 : i64, scratch_operands = 0 : i64, tpu.core_type = #tpu.core_type<tc>} {
    %c0 = arith.constant 0 : index
    %c0_0 = arith.constant 0 : index
    %0 = vector.load %arg0[%c0, %c0_0] : memref<2x32xbf16, #tpu.memory_space<vmem>>, vector<2x32xbf16>
    %c0_1 = arith.constant 0 : index
    %c0_2 = arith.constant 0 : index
    %1 = vector.load %arg1[%c0_1, %c0_2] : memref<32x64xbf16, #tpu.memory_space<vmem>>, vector<32x64xbf16>
    %cst = arith.constant dense<0.000000e+00> : vector<2x64xf32>
    %2 = tpu.matmul %0, %1, %cst {dimension_numbers = #tpu.dot_dimension_numbers<[1], [0], [0], [1], [0, 0, 1, 1], [], []>} : vector<2x32xbf16>, vector<32x64xbf16>, vector<2x64xf32> -> vector<2x64xf32>
    %c0_3 = arith.constant 0 : index
    %c0_4 = arith.constant 0 : index
    %3 = vector.load %arg2[%c0_3, %c0_4] : memref<1x64xf32, #tpu.memory_space<vmem>>, vector<1x64xf32>
    %4 = vector.broadcast %3 : vector<1x64xf32> to vector<2x64xf32>
    %5 = arith.addf %2, %4 : vector<2x64xf32>
    %c0_5 = arith.constant 0 : index
    %c0_6 = arith.constant 0 : index
    %6 = vector.load %arg3[%c0_5, %c0_6] : memref<2x64xf32, #tpu.memory_space<vmem>>, vector<2x64xf32>
    tpu.vector_store %arg3[%c0_5, %c0_6], %5 {strides = array<i32>} : memref<2x64xf32, #tpu.memory_space<vmem>>, vector<2x64xf32>,
    return
  }
}

module attributes {stable_mosaic.version = 11 : i64} {
  func.func @convt_stats_kernel(%arg0: i32, %arg1: i32, %arg2: memref<1x1x3x16xbf16, #tpu.memory_space<vmem>>, %arg3: memref<1x1x3x16xbf16, #tpu.memory_space<vmem>>, %arg4: memref<4x16x128xbf16, #tpu.memory_space<vmem>>, %arg5: memref<1x1x2x128xbf16, #tpu.memory_space<vmem>>, %arg6: memref<1x2x128xf32, #tpu.memory_space<vmem>>) attributes {dimension_semantics = [#tpu.dimension_semantics<parallel>, #tpu.dimension_semantics<arbitrary>], iteration_bounds = array<i64: 2, 2>, scalar_prefetch = 0 : i64, scratch_operands = 0 : i64, tpu.core_type = #tpu.core_type<tc>, window_params = [{transform_indices = @transform_0, window_bounds = array<i64: 1, 1, 3, 16>}, {transform_indices = @transform_1, window_bounds = array<i64: 1, 1, 3, 16>}, {pipeline_mode = #tpu.pipeline_mode<synchronous>, transform_indices = @transform_2, window_bounds = array<i64: 4, 16, 128>}, {transform_indices = @transform_3, window_bounds = array<i64: 1, 1, 2, 128>}, {transform_indices = @transform_4, window_bounds = array<i64: 1, 2, 128>}]} {
    %c0 = arith.constant 0 : index
    %c0_0 = arith.constant 0 : index
    %c0_1 = arith.constant 0 : index
    %c0_2 = arith.constant 0 : index
    %0 = vector.load %arg2[%c0, %c0_0, %c0_1, %c0_2] : memref<1x1x3x16xbf16, #tpu.memory_space<vmem>>, vector<1x1x3x16xbf16>
    %1 = vector.shape_cast %0 : vector<1x1x3x16xbf16> to vector<3x16xbf16>
    %c0_3 = arith.constant 0 : index
    %c0_4 = arith.constant 0 : index
    %c0_5 = arith.constant 0 : index
    %c0_6 = arith.constant 0 : index
    %2 = vector.load %arg3[%c0_3, %c0_4, %c0_5, %c0_6] : memref<1x1x3x16xbf16, #tpu.memory_space<vmem>>, vector<1x1x3x16xbf16>
    %3 = vector.shape_cast %2 : vector<1x1x3x16xbf16> to vector<3x16xbf16>
    %4 = vector.extract_strided_slice %1 {offsets = [0, 0], sizes = [2, 16], strides = [1, 1]} : vector<3x16xbf16> to vector<2x16xbf16>
    %c0_7 = arith.constant 0 : index
    %c0_8 = arith.constant 0 : index
    %c0_9 = arith.constant 0 : index
    %5 = vector.load %arg4[%c0_7, %c0_8, %c0_9] : memref<4x16x128xbf16, #tpu.memory_space<vmem>>, vector<1x16x128xbf16>
    %6 = vector.shape_cast %5 : vector<1x16x128xbf16> to vector<16x128xbf16>
    %cst = arith.constant dense<0.000000e+00> : vector<2x128xf32>
    %7 = tpu.matmul %4, %6, %cst {dimension_numbers = #tpu.dot_dimension_numbers<[1], [0], [0], [1], [0, 0, 1, 1], [], []>} : vector<2x16xbf16>, vector<16x128xbf16>, vector<2x128xf32> -> vector<2x128xf32>
    %8 = vector.extract_strided_slice %1 {offsets = [1, 0], sizes = [2, 16], strides = [1, 1]} : vector<3x16xbf16> to vector<2x16xbf16>
    %c1 = arith.constant 1 : index
    %c0_10 = arith.constant 0 : index
    %c0_11 = arith.constant 0 : index
    %9 = vector.load %arg4[%c1, %c0_10, %c0_11] : memref<4x16x128xbf16, #tpu.memory_space<vmem>>, vector<1x16x128xbf16>
    %10 = vector.shape_cast %9 : vector<1x16x128xbf16> to vector<16x128xbf16>
    %cst_12 = arith.constant dense<0.000000e+00> : vector<2x128xf32>
    %11 = tpu.matmul %8, %10, %cst_12 {dimension_numbers = #tpu.dot_dimension_numbers<[1], [0], [0], [1], [0, 0, 1, 1], [], []>} : vector<2x16xbf16>, vector<16x128xbf16>, vector<2x128xf32> -> vector<2x128xf32>
    %12 = arith.addf %7, %11 : vector<2x128xf32>
    %13 = vector.extract_strided_slice %3 {offsets = [0, 0], sizes = [2, 16], strides = [1, 1]} : vector<3x16xbf16> to vector<2x16xbf16>
    %c2 = arith.constant 2 : index
    %c0_13 = arith.constant 0 : index
    %c0_14 = arith.constant 0 : index
    %14 = vector.load %arg4[%c2, %c0_13, %c0_14] : memref<4x16x128xbf16, #tpu.memory_space<vmem>>, vector<1x16x128xbf16>
    %15 = vector.shape_cast %14 : vector<1x16x128xbf16> to vector<16x128xbf16>
    %cst_15 = arith.constant dense<0.000000e+00> : vector<2x128xf32>
    %16 = tpu.matmul %13, %15, %cst_15 {dimension_numbers = #tpu.dot_dimension_numbers<[1], [0], [0], [1], [0, 0, 1, 1], [], []>} : vector<2x16xbf16>, vector<16x128xbf16>, vector<2x128xf32> -> vector<2x128xf32>
    %17 = arith.addf %12, %16 : vector<2x128xf32>
    %18 = vector.extract_strided_slice %3 {offsets = [1, 0], sizes = [2, 16], strides = [1, 1]} : vector<3x16xbf16> to vector<2x16xbf16>
    %c3 = arith.constant 3 : index
    %c0_16 = arith.constant 0 : index
    %c0_17 = arith.constant 0 : index
    %19 = vector.load %arg4[%c3, %c0_16, %c0_17] : memref<4x16x128xbf16, #tpu.memory_space<vmem>>, vector<1x16x128xbf16>
    %20 = vector.shape_cast %19 : vector<1x16x128xbf16> to vector<16x128xbf16>
    %cst_18 = arith.constant dense<0.000000e+00> : vector<2x128xf32>
    %21 = tpu.matmul %18, %20, %cst_18 {dimension_numbers = #tpu.dot_dimension_numbers<[1], [0], [0], [1], [0, 0, 1, 1], [], []>} : vector<2x16xbf16>, vector<16x128xbf16>, vector<2x128xf32> -> vector<2x128xf32>
    %22 = arith.addf %17, %21 : vector<2x128xf32>
    %23 = arith.truncf %22 : vector<2x128xf32> to vector<2x128xbf16>
    %c0_19 = arith.constant 0 : index
    %c0_20 = arith.constant 0 : index
    %c0_21 = arith.constant 0 : index
    %c0_22 = arith.constant 0 : index
    %24 = vector.load %arg5[%c0_19, %c0_20, %c0_21, %c0_22] : memref<1x1x2x128xbf16, #tpu.memory_space<vmem>>, vector<1x1x2x128xbf16>
    %25 = vector.shape_cast %24 : vector<1x1x2x128xbf16> to vector<2x128xbf16>
    %26 = vector.shape_cast %23 : vector<2x128xbf16> to vector<1x1x2x128xbf16>
    tpu.vector_store %arg5[%c0_19, %c0_20, %c0_21, %c0_22], %26 {strides = array<i32>} : memref<1x1x2x128xbf16, #tpu.memory_space<vmem>>, vector<1x1x2x128xbf16>,
    %c0_i32 = arith.constant 0 : i32
    %27 = arith.cmpi eq, %arg1, %c0_i32 : i32
    %28 = arith.extui %27 : i1 to i32
    %c0_i32_23 = arith.constant 0 : i32
    %29 = arith.cmpi ne, %28, %c0_i32_23 : i32
    scf.if %29 {
      %cst_38 = arith.constant 0.000000e+00 : f32
      %47 = vector.broadcast %cst_38 : f32 to vector<1x2x128xf32>
      %c0_39 = arith.constant 0 : index
      %c0_40 = arith.constant 0 : index
      %c0_41 = arith.constant 0 : index
      %48 = vector.load %arg6[%c0_39, %c0_40, %c0_41] : memref<1x2x128xf32, #tpu.memory_space<vmem>>, vector<1x2x128xf32>
      tpu.vector_store %arg6[%c0_39, %c0_40, %c0_41], %47 {strides = array<i32>} : memref<1x2x128xf32, #tpu.memory_space<vmem>>, vector<1x2x128xf32>,
    } else {
    }
    %c0_24 = arith.constant 0 : index
    %c0_25 = arith.constant 0 : index
    %c0_26 = arith.constant 0 : index
    %30 = vector.load %arg6[%c0_24, %c0_25, %c0_26] : memref<1x2x128xf32, #tpu.memory_space<vmem>>, vector<1x1x128xf32>
    %31 = vector.shape_cast %30 : vector<1x1x128xf32> to vector<1x128xf32>
    %cst_27 = arith.constant dense<0.000000e+00> : vector<128xf32>
    %32 = vector.multi_reduction <add>, %22, %cst_27 [0] : vector<2x128xf32> to vector<128xf32>
    %33 = vector.shape_cast %32 : vector<128xf32> to vector<1x128xf32>
    %34 = arith.addf %31, %33 : vector<1x128xf32>
    %c0_28 = arith.constant 0 : index
    %c0_29 = arith.constant 0 : index
    %c0_30 = arith.constant 0 : index
    %35 = vector.load %arg6[%c0_28, %c0_29, %c0_30] : memref<1x2x128xf32, #tpu.memory_space<vmem>>, vector<1x1x128xf32>
    %36 = vector.shape_cast %35 : vector<1x1x128xf32> to vector<1x128xf32>
    %37 = vector.shape_cast %34 : vector<1x128xf32> to vector<1x1x128xf32>
    tpu.vector_store %arg6[%c0_28, %c0_29, %c0_30], %37 {strides = array<i32>} : memref<1x2x128xf32, #tpu.memory_space<vmem>>, vector<1x1x128xf32>,
    %c0_31 = arith.constant 0 : index
    %c1_32 = arith.constant 1 : index
    %c0_33 = arith.constant 0 : index
    %38 = vector.load %arg6[%c0_31, %c1_32, %c0_33] : memref<1x2x128xf32, #tpu.memory_space<vmem>>, vector<1x1x128xf32>
    %39 = vector.shape_cast %38 : vector<1x1x128xf32> to vector<1x128xf32>
    %40 = arith.mulf %22, %22 : vector<2x128xf32>
    %cst_34 = arith.constant dense<0.000000e+00> : vector<128xf32>
    %41 = vector.multi_reduction <add>, %40, %cst_34 [0] : vector<2x128xf32> to vector<128xf32>
    %42 = vector.shape_cast %41 : vector<128xf32> to vector<1x128xf32>
    %43 = arith.addf %39, %42 : vector<1x128xf32>
    %c0_35 = arith.constant 0 : index
    %c1_36 = arith.constant 1 : index
    %c0_37 = arith.constant 0 : index
    %44 = vector.load %arg6[%c0_35, %c1_36, %c0_37] : memref<1x2x128xf32, #tpu.memory_space<vmem>>, vector<1x1x128xf32>
    %45 = vector.shape_cast %44 : vector<1x1x128xf32> to vector<1x128xf32>
    %46 = vector.shape_cast %43 : vector<1x128xf32> to vector<1x1x128xf32>
    tpu.vector_store %arg6[%c0_35, %c1_36, %c0_37], %46 {strides = array<i32>} : memref<1x2x128xf32, #tpu.memory_space<vmem>>, vector<1x1x128xf32>,
    return
  }
  func.func @transform_0(%arg0: i32, %arg1: i32) -> (i32, i32, i32, i32) {
    %c0_i32 = arith.constant 0 : i32
    %c0_i32_0 = arith.constant 0 : i32
    %c0_i32_1 = arith.constant 0 : i32
    return %arg0, %arg1, %c0_i32, %c0_i32_0 : i32, i32, i32, i32
  }
  func.func @transform_1(%arg0: i32, %arg1: i32) -> (i32, i32, i32, i32) {
    %c1_i32 = arith.constant 1 : i32
    %0 = arith.addi %arg1, %c1_i32 : i32
    %c0_i32 = arith.constant 0 : i32
    %c0_i32_0 = arith.constant 0 : i32
    %c0_i32_1 = arith.constant 0 : i32
    return %arg0, %0, %c0_i32, %c0_i32_0 : i32, i32, i32, i32
  }
  func.func @transform_2(%arg0: i32, %arg1: i32) -> (i32, i32, i32) {
    %c0_i32 = arith.constant 0 : i32
    %c0_i32_0 = arith.constant 0 : i32
    %c0_i32_1 = arith.constant 0 : i32
    %c0_i32_2 = arith.constant 0 : i32
    return %c0_i32, %c0_i32_0, %c0_i32_1 : i32, i32, i32
  }
  func.func @transform_3(%arg0: i32, %arg1: i32) -> (i32, i32, i32, i32) {
    %c0_i32 = arith.constant 0 : i32
    %c0_i32_0 = arith.constant 0 : i32
    %c0_i32_1 = arith.constant 0 : i32
    return %arg0, %arg1, %c0_i32, %c0_i32_0 : i32, i32, i32, i32
  }
  func.func @transform_4(%arg0: i32, %arg1: i32) -> (i32, i32, i32) {
    %c0_i32 = arith.constant 0 : i32
    %c0_i32_0 = arith.constant 0 : i32
    %c0_i32_1 = arith.constant 0 : i32
    return %arg0, %c0_i32, %c0_i32_0 : i32, i32, i32
  }
}

module attributes {stable_mosaic.version = 11 : i64} {
  func.func @convt_stats_kernel(%arg0: i32, %arg1: i32, %arg2: memref<1x1x5x8xbf16, #tpu.memory_space<vmem>>, %arg3: memref<1x1x5x8xbf16, #tpu.memory_space<vmem>>, %arg4: memref<4x8x128xbf16, #tpu.memory_space<vmem>>, %arg5: memref<1x1x4x128xbf16, #tpu.memory_space<vmem>>, %arg6: memref<1x2x128xf32, #tpu.memory_space<vmem>>) attributes {dimension_semantics = [#tpu.dimension_semantics<parallel>, #tpu.dimension_semantics<arbitrary>], iteration_bounds = array<i64: 2, 4>, scalar_prefetch = 0 : i64, scratch_operands = 0 : i64, tpu.core_type = #tpu.core_type<tc>, window_params = [{transform_indices = @transform_0, window_bounds = array<i64: 1, 1, 5, 8>}, {transform_indices = @transform_1, window_bounds = array<i64: 1, 1, 5, 8>}, {pipeline_mode = #tpu.pipeline_mode<synchronous>, transform_indices = @transform_2, window_bounds = array<i64: 4, 8, 128>}, {transform_indices = @transform_3, window_bounds = array<i64: 1, 1, 4, 128>}, {transform_indices = @transform_4, window_bounds = array<i64: 1, 2, 128>}]} {
    %c0 = arith.constant 0 : index
    %c0_0 = arith.constant 0 : index
    %c0_1 = arith.constant 0 : index
    %c0_2 = arith.constant 0 : index
    %0 = vector.load %arg2[%c0, %c0_0, %c0_1, %c0_2] : memref<1x1x5x8xbf16, #tpu.memory_space<vmem>>, vector<1x1x5x8xbf16>
    %1 = vector.shape_cast %0 : vector<1x1x5x8xbf16> to vector<5x8xbf16>
    %c0_3 = arith.constant 0 : index
    %c0_4 = arith.constant 0 : index
    %c0_5 = arith.constant 0 : index
    %c0_6 = arith.constant 0 : index
    %2 = vector.load %arg3[%c0_3, %c0_4, %c0_5, %c0_6] : memref<1x1x5x8xbf16, #tpu.memory_space<vmem>>, vector<1x1x5x8xbf16>
    %3 = vector.shape_cast %2 : vector<1x1x5x8xbf16> to vector<5x8xbf16>
    %4 = vector.extract_strided_slice %1 {offsets = [0, 0], sizes = [4, 8], strides = [1, 1]} : vector<5x8xbf16> to vector<4x8xbf16>
    %c0_7 = arith.constant 0 : index
    %c0_8 = arith.constant 0 : index
    %c0_9 = arith.constant 0 : index
    %5 = vector.load %arg4[%c0_7, %c0_8, %c0_9] : memref<4x8x128xbf16, #tpu.memory_space<vmem>>, vector<1x8x128xbf16>
    %6 = vector.shape_cast %5 : vector<1x8x128xbf16> to vector<8x128xbf16>
    %cst = arith.constant dense<0.000000e+00> : vector<4x128xf32>
    %7 = tpu.matmul %4, %6, %cst {dimension_numbers = #tpu.dot_dimension_numbers<[1], [0], [0], [1], [0, 0, 1, 1], [], []>} : vector<4x8xbf16>, vector<8x128xbf16>, vector<4x128xf32> -> vector<4x128xf32>
    %8 = vector.extract_strided_slice %1 {offsets = [1, 0], sizes = [4, 8], strides = [1, 1]} : vector<5x8xbf16> to vector<4x8xbf16>
    %c1 = arith.constant 1 : index
    %c0_10 = arith.constant 0 : index
    %c0_11 = arith.constant 0 : index
    %9 = vector.load %arg4[%c1, %c0_10, %c0_11] : memref<4x8x128xbf16, #tpu.memory_space<vmem>>, vector<1x8x128xbf16>
    %10 = vector.shape_cast %9 : vector<1x8x128xbf16> to vector<8x128xbf16>
    %cst_12 = arith.constant dense<0.000000e+00> : vector<4x128xf32>
    %11 = tpu.matmul %8, %10, %cst_12 {dimension_numbers = #tpu.dot_dimension_numbers<[1], [0], [0], [1], [0, 0, 1, 1], [], []>} : vector<4x8xbf16>, vector<8x128xbf16>, vector<4x128xf32> -> vector<4x128xf32>
    %12 = arith.addf %7, %11 : vector<4x128xf32>
    %13 = vector.extract_strided_slice %3 {offsets = [0, 0], sizes = [4, 8], strides = [1, 1]} : vector<5x8xbf16> to vector<4x8xbf16>
    %c2 = arith.constant 2 : index
    %c0_13 = arith.constant 0 : index
    %c0_14 = arith.constant 0 : index
    %14 = vector.load %arg4[%c2, %c0_13, %c0_14] : memref<4x8x128xbf16, #tpu.memory_space<vmem>>, vector<1x8x128xbf16>
    %15 = vector.shape_cast %14 : vector<1x8x128xbf16> to vector<8x128xbf16>
    %cst_15 = arith.constant dense<0.000000e+00> : vector<4x128xf32>
    %16 = tpu.matmul %13, %15, %cst_15 {dimension_numbers = #tpu.dot_dimension_numbers<[1], [0], [0], [1], [0, 0, 1, 1], [], []>} : vector<4x8xbf16>, vector<8x128xbf16>, vector<4x128xf32> -> vector<4x128xf32>
    %17 = arith.addf %12, %16 : vector<4x128xf32>
    %18 = vector.extract_strided_slice %3 {offsets = [1, 0], sizes = [4, 8], strides = [1, 1]} : vector<5x8xbf16> to vector<4x8xbf16>
    %c3 = arith.constant 3 : index
    %c0_16 = arith.constant 0 : index
    %c0_17 = arith.constant 0 : index
    %19 = vector.load %arg4[%c3, %c0_16, %c0_17] : memref<4x8x128xbf16, #tpu.memory_space<vmem>>, vector<1x8x128xbf16>
    %20 = vector.shape_cast %19 : vector<1x8x128xbf16> to vector<8x128xbf16>
    %cst_18 = arith.constant dense<0.000000e+00> : vector<4x128xf32>
    %21 = tpu.matmul %18, %20, %cst_18 {dimension_numbers = #tpu.dot_dimension_numbers<[1], [0], [0], [1], [0, 0, 1, 1], [], []>} : vector<4x8xbf16>, vector<8x128xbf16>, vector<4x128xf32> -> vector<4x128xf32>
    %22 = arith.addf %17, %21 : vector<4x128xf32>
    %23 = arith.truncf %22 : vector<4x128xf32> to vector<4x128xbf16>
    %c0_19 = arith.constant 0 : index
    %c0_20 = arith.constant 0 : index
    %c0_21 = arith.constant 0 : index
    %c0_22 = arith.constant 0 : index
    %24 = vector.load %arg5[%c0_19, %c0_20, %c0_21, %c0_22] : memref<1x1x4x128xbf16, #tpu.memory_space<vmem>>, vector<1x1x4x128xbf16>
    %25 = vector.shape_cast %24 : vector<1x1x4x128xbf16> to vector<4x128xbf16>
    %26 = vector.shape_cast %23 : vector<4x128xbf16> to vector<1x1x4x128xbf16>
    tpu.vector_store %arg5[%c0_19, %c0_20, %c0_21, %c0_22], %26 {strides = array<i32>} : memref<1x1x4x128xbf16, #tpu.memory_space<vmem>>, vector<1x1x4x128xbf16>,
    %c0_i32 = arith.constant 0 : i32
    %27 = arith.cmpi eq, %arg1, %c0_i32 : i32
    %28 = arith.extui %27 : i1 to i32
    %c0_i32_23 = arith.constant 0 : i32
    %29 = arith.cmpi ne, %28, %c0_i32_23 : i32
    scf.if %29 {
      %cst_38 = arith.constant 0.000000e+00 : f32
      %47 = vector.broadcast %cst_38 : f32 to vector<1x2x128xf32>
      %c0_39 = arith.constant 0 : index
      %c0_40 = arith.constant 0 : index
      %c0_41 = arith.constant 0 : index
      %48 = vector.load %arg6[%c0_39, %c0_40, %c0_41] : memref<1x2x128xf32, #tpu.memory_space<vmem>>, vector<1x2x128xf32>
      tpu.vector_store %arg6[%c0_39, %c0_40, %c0_41], %47 {strides = array<i32>} : memref<1x2x128xf32, #tpu.memory_space<vmem>>, vector<1x2x128xf32>,
    } else {
    }
    %c0_24 = arith.constant 0 : index
    %c0_25 = arith.constant 0 : index
    %c0_26 = arith.constant 0 : index
    %30 = vector.load %arg6[%c0_24, %c0_25, %c0_26] : memref<1x2x128xf32, #tpu.memory_space<vmem>>, vector<1x1x128xf32>
    %31 = vector.shape_cast %30 : vector<1x1x128xf32> to vector<1x128xf32>
    %cst_27 = arith.constant dense<0.000000e+00> : vector<128xf32>
    %32 = vector.multi_reduction <add>, %22, %cst_27 [0] : vector<4x128xf32> to vector<128xf32>
    %33 = vector.shape_cast %32 : vector<128xf32> to vector<1x128xf32>
    %34 = arith.addf %31, %33 : vector<1x128xf32>
    %c0_28 = arith.constant 0 : index
    %c0_29 = arith.constant 0 : index
    %c0_30 = arith.constant 0 : index
    %35 = vector.load %arg6[%c0_28, %c0_29, %c0_30] : memref<1x2x128xf32, #tpu.memory_space<vmem>>, vector<1x1x128xf32>
    %36 = vector.shape_cast %35 : vector<1x1x128xf32> to vector<1x128xf32>
    %37 = vector.shape_cast %34 : vector<1x128xf32> to vector<1x1x128xf32>
    tpu.vector_store %arg6[%c0_28, %c0_29, %c0_30], %37 {strides = array<i32>} : memref<1x2x128xf32, #tpu.memory_space<vmem>>, vector<1x1x128xf32>,
    %c0_31 = arith.constant 0 : index
    %c1_32 = arith.constant 1 : index
    %c0_33 = arith.constant 0 : index
    %38 = vector.load %arg6[%c0_31, %c1_32, %c0_33] : memref<1x2x128xf32, #tpu.memory_space<vmem>>, vector<1x1x128xf32>
    %39 = vector.shape_cast %38 : vector<1x1x128xf32> to vector<1x128xf32>
    %40 = arith.mulf %22, %22 : vector<4x128xf32>
    %cst_34 = arith.constant dense<0.000000e+00> : vector<128xf32>
    %41 = vector.multi_reduction <add>, %40, %cst_34 [0] : vector<4x128xf32> to vector<128xf32>
    %42 = vector.shape_cast %41 : vector<128xf32> to vector<1x128xf32>
    %43 = arith.addf %39, %42 : vector<1x128xf32>
    %c0_35 = arith.constant 0 : index
    %c1_36 = arith.constant 1 : index
    %c0_37 = arith.constant 0 : index
    %44 = vector.load %arg6[%c0_35, %c1_36, %c0_37] : memref<1x2x128xf32, #tpu.memory_space<vmem>>, vector<1x1x128xf32>
    %45 = vector.shape_cast %44 : vector<1x1x128xf32> to vector<1x128xf32>
    %46 = vector.shape_cast %43 : vector<1x128xf32> to vector<1x1x128xf32>
    tpu.vector_store %arg6[%c0_35, %c1_36, %c0_37], %46 {strides = array<i32>} : memref<1x2x128xf32, #tpu.memory_space<vmem>>, vector<1x1x128xf32>,
    return
  }
  func.func @transform_0(%arg0: i32, %arg1: i32) -> (i32, i32, i32, i32) {
    %c0_i32 = arith.constant 0 : i32
    %c0_i32_0 = arith.constant 0 : i32
    %c0_i32_1 = arith.constant 0 : i32
    return %arg0, %arg1, %c0_i32, %c0_i32_0 : i32, i32, i32, i32
  }
  func.func @transform_1(%arg0: i32, %arg1: i32) -> (i32, i32, i32, i32) {
    %c1_i32 = arith.constant 1 : i32
    %0 = arith.addi %arg1, %c1_i32 : i32
    %c0_i32 = arith.constant 0 : i32
    %c0_i32_0 = arith.constant 0 : i32
    %c0_i32_1 = arith.constant 0 : i32
    return %arg0, %0, %c0_i32, %c0_i32_0 : i32, i32, i32, i32
  }
  func.func @transform_2(%arg0: i32, %arg1: i32) -> (i32, i32, i32) {
    %c0_i32 = arith.constant 0 : i32
    %c0_i32_0 = arith.constant 0 : i32
    %c0_i32_1 = arith.constant 0 : i32
    %c0_i32_2 = arith.constant 0 : i32
    return %c0_i32, %c0_i32_0, %c0_i32_1 : i32, i32, i32
  }
  func.func @transform_3(%arg0: i32, %arg1: i32) -> (i32, i32, i32, i32) {
    %c0_i32 = arith.constant 0 : i32
    %c0_i32_0 = arith.constant 0 : i32
    %c0_i32_1 = arith.constant 0 : i32
    return %arg0, %arg1, %c0_i32, %c0_i32_0 : i32, i32, i32, i32
  }
  func.func @transform_4(%arg0: i32, %arg1: i32) -> (i32, i32, i32) {
    %c0_i32 = arith.constant 0 : i32
    %c0_i32_0 = arith.constant 0 : i32
    %c0_i32_1 = arith.constant 0 : i32
    return %arg0, %c0_i32, %c0_i32_0 : i32, i32, i32
  }
}

module attributes {stable_mosaic.version = 11 : i64} {
  func.func @final_conv_tanh_kernel(%arg0: i32, %arg1: i32, %arg2: memref<1x1x8x10xbf16, #tpu.memory_space<vmem>>, %arg3: memref<1x1x8x10xbf16, #tpu.memory_space<vmem>>, %arg4: memref<1x1x8x10xbf16, #tpu.memory_space<vmem>>, %arg5: memref<3x3x8x1xf32, #tpu.memory_space<vmem>>, %arg6: memref<1x1xf32, #tpu.memory_space<vmem>>, %arg7: memref<1x1x1x8xf32, #tpu.memory_space<vmem>>) attributes {dimension_semantics = [#tpu.dimension_semantics<parallel>, #tpu.dimension_semantics<parallel>], iteration_bounds = array<i64: 2, 8>, scalar_prefetch = 0 : i64, scratch_operands = 0 : i64, tpu.core_type = #tpu.core_type<tc>, window_params = [{transform_indices = @transform_0, window_bounds = array<i64: 1, 1, 8, 10>}, {transform_indices = @transform_1, window_bounds = array<i64: 1, 1, 8, 10>}, {transform_indices = @transform_2, window_bounds = array<i64: 1, 1, 8, 10>}, {pipeline_mode = #tpu.pipeline_mode<synchronous>, transform_indices = @transform_3, window_bounds = array<i64: 3, 3, 8, 1>}, {pipeline_mode = #tpu.pipeline_mode<synchronous>, transform_indices = @transform_4, window_bounds = array<i64: 1, 1>}, {transform_indices = @transform_5, window_bounds = array<i64: 1, 1, 1, 8>}]} {
    %c0 = arith.constant 0 : index
    %c0_0 = arith.constant 0 : index
    %c0_1 = arith.constant 0 : index
    %c0_2 = arith.constant 0 : index
    %0 = vector.load %arg2[%c0, %c0_0, %c0_1, %c0_2] : memref<1x1x8x10xbf16, #tpu.memory_space<vmem>>, vector<1x1x8x10xbf16>
    %1 = vector.shape_cast %0 : vector<1x1x8x10xbf16> to vector<8x10xbf16>
    %2 = arith.extf %1 : vector<8x10xbf16> to vector<8x10xf32>
    %c0_3 = arith.constant 0 : index
    %c0_4 = arith.constant 0 : index
    %c0_5 = arith.constant 0 : index
    %c0_6 = arith.constant 0 : index
    %3 = vector.load %arg3[%c0_3, %c0_4, %c0_5, %c0_6] : memref<1x1x8x10xbf16, #tpu.memory_space<vmem>>, vector<1x1x8x10xbf16>
    %4 = vector.shape_cast %3 : vector<1x1x8x10xbf16> to vector<8x10xbf16>
    %5 = arith.extf %4 : vector<8x10xbf16> to vector<8x10xf32>
    %c0_7 = arith.constant 0 : index
    %c0_8 = arith.constant 0 : index
    %c0_9 = arith.constant 0 : index
    %c0_10 = arith.constant 0 : index
    %6 = vector.load %arg4[%c0_7, %c0_8, %c0_9, %c0_10] : memref<1x1x8x10xbf16, #tpu.memory_space<vmem>>, vector<1x1x8x10xbf16>
    %7 = vector.shape_cast %6 : vector<1x1x8x10xbf16> to vector<8x10xbf16>
    %8 = arith.extf %7 : vector<8x10xbf16> to vector<8x10xf32>
    %cst = arith.constant 0.000000e+00 : f32
    %9 = vector.broadcast %cst : f32 to vector<8x8xf32>
    %10 = vector.extract_strided_slice %2 {offsets = [0, 0], sizes = [8, 8], strides = [1, 1]} : vector<8x10xf32> to vector<8x8xf32>
    %c0_11 = arith.constant 0 : index
    %c0_12 = arith.constant 0 : index
    %c0_13 = arith.constant 0 : index
    %c0_14 = arith.constant 0 : index
    %11 = vector.load %arg5[%c0_11, %c0_12, %c0_13, %c0_14] : memref<3x3x8x1xf32, #tpu.memory_space<vmem>>, vector<1x1x8x1xf32>
    %12 = vector.shape_cast %11 : vector<1x1x8x1xf32> to vector<8x1xf32>
    %13 = vector.broadcast %12 : vector<8x1xf32> to vector<8x8xf32>
    %14 = arith.mulf %10, %13 : vector<8x8xf32>
    %15 = arith.addf %9, %14 : vector<8x8xf32>
    %16 = vector.extract_strided_slice %2 {offsets = [0, 1], sizes = [8, 8], strides = [1, 1]} : vector<8x10xf32> to vector<8x8xf32>
    %c0_15 = arith.constant 0 : index
    %c1 = arith.constant 1 : index
    %c0_16 = arith.constant 0 : index
    %c0_17 = arith.constant 0 : index
    %17 = vector.load %arg5[%c0_15, %c1, %c0_16, %c0_17] : memref<3x3x8x1xf32, #tpu.memory_space<vmem>>, vector<1x1x8x1xf32>
    %18 = vector.shape_cast %17 : vector<1x1x8x1xf32> to vector<8x1xf32>
    %19 = vector.broadcast %18 : vector<8x1xf32> to vector<8x8xf32>
    %20 = arith.mulf %16, %19 : vector<8x8xf32>
    %21 = arith.addf %15, %20 : vector<8x8xf32>
    %22 = vector.extract_strided_slice %2 {offsets = [0, 2], sizes = [8, 8], strides = [1, 1]} : vector<8x10xf32> to vector<8x8xf32>
    %c0_18 = arith.constant 0 : index
    %c2 = arith.constant 2 : index
    %c0_19 = arith.constant 0 : index
    %c0_20 = arith.constant 0 : index
    %23 = vector.load %arg5[%c0_18, %c2, %c0_19, %c0_20] : memref<3x3x8x1xf32, #tpu.memory_space<vmem>>, vector<1x1x8x1xf32>
    %24 = vector.shape_cast %23 : vector<1x1x8x1xf32> to vector<8x1xf32>
    %25 = vector.broadcast %24 : vector<8x1xf32> to vector<8x8xf32>
    %26 = arith.mulf %22, %25 : vector<8x8xf32>
    %27 = arith.addf %21, %26 : vector<8x8xf32>
    %28 = vector.extract_strided_slice %5 {offsets = [0, 0], sizes = [8, 8], strides = [1, 1]} : vector<8x10xf32> to vector<8x8xf32>
    %c1_21 = arith.constant 1 : index
    %c0_22 = arith.constant 0 : index
    %c0_23 = arith.constant 0 : index
    %c0_24 = arith.constant 0 : index
    %29 = vector.load %arg5[%c1_21, %c0_22, %c0_23, %c0_24] : memref<3x3x8x1xf32, #tpu.memory_space<vmem>>, vector<1x1x8x1xf32>
    %30 = vector.shape_cast %29 : vector<1x1x8x1xf32> to vector<8x1xf32>
    %31 = vector.broadcast %30 : vector<8x1xf32> to vector<8x8xf32>
    %32 = arith.mulf %28, %31 : vector<8x8xf32>
    %33 = arith.addf %27, %32 : vector<8x8xf32>
    %34 = vector.extract_strided_slice %5 {offsets = [0, 1], sizes = [8, 8], strides = [1, 1]} : vector<8x10xf32> to vector<8x8xf32>
    %c1_25 = arith.constant 1 : index
    %c1_26 = arith.constant 1 : index
    %c0_27 = arith.constant 0 : index
    %c0_28 = arith.constant 0 : index
    %35 = vector.load %arg5[%c1_25, %c1_26, %c0_27, %c0_28] : memref<3x3x8x1xf32, #tpu.memory_space<vmem>>, vector<1x1x8x1xf32>
    %36 = vector.shape_cast %35 : vector<1x1x8x1xf32> to vector<8x1xf32>
    %37 = vector.broadcast %36 : vector<8x1xf32> to vector<8x8xf32>
    %38 = arith.mulf %34, %37 : vector<8x8xf32>
    %39 = arith.addf %33, %38 : vector<8x8xf32>
    %40 = vector.extract_strided_slice %5 {offsets = [0, 2], sizes = [8, 8], strides = [1, 1]} : vector<8x10xf32> to vector<8x8xf32>
    %c1_29 = arith.constant 1 : index
    %c2_30 = arith.constant 2 : index
    %c0_31 = arith.constant 0 : index
    %c0_32 = arith.constant 0 : index
    %41 = vector.load %arg5[%c1_29, %c2_30, %c0_31, %c0_32] : memref<3x3x8x1xf32, #tpu.memory_space<vmem>>, vector<1x1x8x1xf32>
    %42 = vector.shape_cast %41 : vector<1x1x8x1xf32> to vector<8x1xf32>
    %43 = vector.broadcast %42 : vector<8x1xf32> to vector<8x8xf32>
    %44 = arith.mulf %40, %43 : vector<8x8xf32>
    %45 = arith.addf %39, %44 : vector<8x8xf32>
    %46 = vector.extract_strided_slice %8 {offsets = [0, 0], sizes = [8, 8], strides = [1, 1]} : vector<8x10xf32> to vector<8x8xf32>
    %c2_33 = arith.constant 2 : index
    %c0_34 = arith.constant 0 : index
    %c0_35 = arith.constant 0 : index
    %c0_36 = arith.constant 0 : index
    %47 = vector.load %arg5[%c2_33, %c0_34, %c0_35, %c0_36] : memref<3x3x8x1xf32, #tpu.memory_space<vmem>>, vector<1x1x8x1xf32>
    %48 = vector.shape_cast %47 : vector<1x1x8x1xf32> to vector<8x1xf32>
    %49 = vector.broadcast %48 : vector<8x1xf32> to vector<8x8xf32>
    %50 = arith.mulf %46, %49 : vector<8x8xf32>
    %51 = arith.addf %45, %50 : vector<8x8xf32>
    %52 = vector.extract_strided_slice %8 {offsets = [0, 1], sizes = [8, 8], strides = [1, 1]} : vector<8x10xf32> to vector<8x8xf32>
    %c2_37 = arith.constant 2 : index
    %c1_38 = arith.constant 1 : index
    %c0_39 = arith.constant 0 : index
    %c0_40 = arith.constant 0 : index
    %53 = vector.load %arg5[%c2_37, %c1_38, %c0_39, %c0_40] : memref<3x3x8x1xf32, #tpu.memory_space<vmem>>, vector<1x1x8x1xf32>
    %54 = vector.shape_cast %53 : vector<1x1x8x1xf32> to vector<8x1xf32>
    %55 = vector.broadcast %54 : vector<8x1xf32> to vector<8x8xf32>
    %56 = arith.mulf %52, %55 : vector<8x8xf32>
    %57 = arith.addf %51, %56 : vector<8x8xf32>
    %58 = vector.extract_strided_slice %8 {offsets = [0, 2], sizes = [8, 8], strides = [1, 1]} : vector<8x10xf32> to vector<8x8xf32>
    %c2_41 = arith.constant 2 : index
    %c2_42 = arith.constant 2 : index
    %c0_43 = arith.constant 0 : index
    %c0_44 = arith.constant 0 : index
    %59 = vector.load %arg5[%c2_41, %c2_42, %c0_43, %c0_44] : memref<3x3x8x1xf32, #tpu.memory_space<vmem>>, vector<1x1x8x1xf32>
    %60 = vector.shape_cast %59 : vector<1x1x8x1xf32> to vector<8x1xf32>
    %61 = vector.broadcast %60 : vector<8x1xf32> to vector<8x8xf32>
    %62 = arith.mulf %58, %61 : vector<8x8xf32>
    %63 = arith.addf %57, %62 : vector<8x8xf32>
    %cst_45 = arith.constant dense<0.000000e+00> : vector<8xf32>
    %64 = vector.multi_reduction <add>, %63, %cst_45 [0] : vector<8x8xf32> to vector<8xf32>
    %65 = vector.shape_cast %64 : vector<8xf32> to vector<1x8xf32>
    %c0_46 = arith.constant 0 : index
    %c0_47 = arith.constant 0 : index
    %66 = vector.load %arg6[%c0_46, %c0_47] : memref<1x1xf32, #tpu.memory_space<vmem>>, vector<1x1xf32>
    %67 = vector.broadcast %66 : vector<1x1xf32> to vector<1x8xf32>
    %68 = arith.addf %65, %67 : vector<1x8xf32>
    %69 = math.tanh %68 : vector<1x8xf32>
    %c0_48 = arith.constant 0 : index
    %c0_49 = arith.constant 0 : index
    %c0_50 = arith.constant 0 : index
    %c0_51 = arith.constant 0 : index
    %70 = vector.load %arg7[%c0_48, %c0_49, %c0_50, %c0_51] : memref<1x1x1x8xf32, #tpu.memory_space<vmem>>, vector<1x1x1x8xf32>
    %71 = vector.shape_cast %70 : vector<1x1x1x8xf32> to vector<1x8xf32>
    %72 = vector.shape_cast %69 : vector<1x8xf32> to vector<1x1x1x8xf32>
    tpu.vector_store %arg7[%c0_48, %c0_49, %c0_50, %c0_51], %72 {strides = array<i32>} : memref<1x1x1x8xf32, #tpu.memory_space<vmem>>, vector<1x1x1x8xf32>,
    return
  }
  func.func @transform_0(%arg0: i32, %arg1: i32) -> (i32, i32, i32, i32) {
    %c0_i32 = arith.constant 0 : i32
    %c0_i32_0 = arith.constant 0 : i32
    %c0_i32_1 = arith.constant 0 : i32
    return %arg0, %arg1, %c0_i32, %c0_i32_0 : i32, i32, i32, i32
  }
  func.func @transform_1(%arg0: i32, %arg1: i32) -> (i32, i32, i32, i32) {
    %c1_i32 = arith.constant 1 : i32
    %0 = arith.addi %arg1, %c1_i32 : i32
    %c0_i32 = arith.constant 0 : i32
    %c0_i32_0 = arith.constant 0 : i32
    %c0_i32_1 = arith.constant 0 : i32
    return %arg0, %0, %c0_i32, %c0_i32_0 : i32, i32, i32, i32
  }
  func.func @transform_2(%arg0: i32, %arg1: i32) -> (i32, i32, i32, i32) {
    %c2_i32 = arith.constant 2 : i32
    %0 = arith.addi %arg1, %c2_i32 : i32
    %c0_i32 = arith.constant 0 : i32
    %c0_i32_0 = arith.constant 0 : i32
    %c0_i32_1 = arith.constant 0 : i32
    return %arg0, %0, %c0_i32, %c0_i32_0 : i32, i32, i32, i32
  }
  func.func @transform_3(%arg0: i32, %arg1: i32) -> (i32, i32, i32, i32) {
    %c0_i32 = arith.constant 0 : i32
    %c0_i32_0 = arith.constant 0 : i32
    %c0_i32_1 = arith.constant 0 : i32
    %c0_i32_2 = arith.constant 0 : i32
    %c0_i32_3 = arith.constant 0 : i32
    return %c0_i32, %c0_i32_0, %c0_i32_1, %c0_i32_2 : i32, i32, i32, i32
  }
  func.func @transform_4(%arg0: i32, %arg1: i32) -> (i32, i32) {
    %c0_i32 = arith.constant 0 : i32
    %c0_i32_0 = arith.constant 0 : i32
    %c0_i32_1 = arith.constant 0 : i32
    return %c0_i32, %c0_i32_0 : i32, i32
  }
  func.func @transform_5(%arg0: i32, %arg1: i32) -> (i32, i32, i32, i32) {
    %c0_i32 = arith.constant 0 : i32
    %c0_i32_0 = arith.constant 0 : i32
    %c0_i32_1 = arith.constant 0 : i32
    return %arg0, %arg1, %c0_i32, %c0_i32_0 : i32, i32, i32, i32
  }
}

</mosaic_0001>

<llo_original>
// kernel: squeeze.4
$region0: #{squeeze.4}
  %s0 = inlined_call_operand.vmem [shape: f32[32], index: 0, kind: input, shape index: {}]
  %s1 = inlined_call_operand.vmem [shape: f32[4,8], index: 1, kind: output, shape index: {}]
  $region1: #{squeeze.4} parent=0
    #allocation0 [shape = 'u8[4096]{0}', space=vmem, size = 0x1000, scoped, tag = 'scoped mem for output reshape']
    #allocation1 [shape = 'u8[4096]{0}', space=vmem, size = 0x1000, scoped, tag = 'scoped mem for input reshape']
    %s3 = sshllo.u32 0, 1
    %v4 = vld [vmem:[%s0] sm:%s3]
    %5 = vst [vmem:[#allocation1] sm:%s3] %v4
    %v6 = vld [vmem:[#allocation1] sm:$0x1]
    %vm7 = vcmask 64512
    %8 = vst.msk [vmem:[#allocation0] sm:$0x1] %vm7, %v6
    %v9 = vld [vmem:[#allocation1] sm:$0x1]
    %10 = vrot.lane.b32.xlu0 %v9, 120
    %v11 = vpop.permute.xlu0 %10
    %vm12 = vcmask 64512
    %s13 = scalar_lea.vmem [#allocation0], 1
    %14 = vst.msk [vmem:[%s13] sm:$0x1] %vm12, %v11
    %v15 = vld [vmem:[#allocation1] sm:$0x1]
    %16 = vrot.lane.b32.xlu0 %v15, 112
    %v17 = vpop.permute.xlu0 %16
    %vm18 = vcmask 64512
    %s19 = scalar_lea.vmem [#allocation0], 2
    %20 = vst.msk [vmem:[%s19] sm:$0x1] %vm18, %v17
    %v21 = vld [vmem:[#allocation1] sm:$0x1]
    %22 = vrot.lane.b32.xlu0 %v21, 104
    %v23 = vpop.permute.xlu0 %22
    %vm24 = vcmask 64512
    %s25 = scalar_lea.vmem [#allocation0], 3
    %26 = vst.msk [vmem:[%s25] sm:$0x1] %vm24, %v23
    %s28 = sshllo.u32 0, 4
    %v30 = vld [vmem:[#allocation0] sm:%s28]
    %s31 = sshllo.u32 0, 4
    %32 = vst [vmem:[%s1] sm:%s31] %v30

// kernel: tile.27
$region0: #{tile.27}
  #allocation0 [shape = 's32[1]{0}', space=sflag, size = 0x4, scoped, tag = 'scoped memory for tile.27']
  %s0 = inlined_call_operand.vmem [shape: f32[8], index: 0, kind: input, shape index: {}]
  %s1 = inlined_call_operand.vmem [shape: f32[4,8], index: 1, kind: output, shape index: {}]
  // Predicated region
  $region2: #{tile.27} parent=0 // pred_check
    _
  $region3: #{tile.27} parent=0 // pred_check_branch
    %3 = sbr.rel (0) target = $region5
  $region4: #{tile.27} parent=0 // pred_region
    _
  $region5: #{tile.27} parent=0 // pred_fallthru
    _
  %v4 = vld [vmem:[%s0] ss:$0 sm:$0xff]
  %5 = vst [vmem:[%s1] sm:$0xf] %v4

// kernel: _lambda_.4
$region0: #{_lambda_.4}
  #allocation0 [shape = 'u32[]', space=smem, size = 0x4, offset = 0x4, fixed_abs, tag = 'smem constant byte address 0x4 - core index']
  #allocation1 [shape = 'u32[144,128]{1,0:T(1,128)}', space=vmem, size = 0x12000, scoped, tag = 'internal scratch']
  %s0 = inlined_call_operand.vmem [shape: bf16[2,32], index: 0, kind: input, shape index: {}]
  %s1 = inlined_call_operand.vmem [shape: bf16[32,64], index: 1, kind: input, shape index: {}]
  %s2 = inlined_call_operand.vmem [shape: f32[1,64], index: 2, kind: input, shape index: {}]
  %s3 = inlined_call_operand.vmem [shape: f32[2,64], index: 3, kind: output, shape index: {}]
  %s4 = sld [smem:[#allocation0]]
  $region22: #{_lambda_.4} parent=0
    _
  %s6 = ssub.s32 1, %s4
  %s7 = scalar_select 0, %s6, %s4
  // Predicated region
  $region2: #{_lambda_.4} parent=0 // pred_check
    _
  $region3: #{_lambda_.4} parent=0 // pred_check_branch
    %9 = sbr.rel (0) target = $region5
  $region4: #{_lambda_.4} parent=0 // pred_region
    _
  $region5: #{_lambda_.4} parent=0 // pred_fallthru
    _
  // Predicated region
  $region6: #{_lambda_.4} parent=0 // pred_check
    _
  $region7: #{_lambda_.4} parent=0 // pred_check_branch
    %11 = sbr.rel (0) target = $region9
  $region8: #{_lambda_.4} parent=0 // pred_region
    _
  $region9: #{_lambda_.4} parent=0 // pred_fallthru
    _
  // Predicated region
  $region10: #{_lambda_.4} parent=0 // pred_check
    _
  $region11: #{_lambda_.4} parent=0 // pred_check_branch
    %13 = sbr.rel (0) target = $region13
  $region12: #{_lambda_.4} parent=0 // pred_region
    _
  $region13: #{_lambda_.4} parent=0 // pred_fallthru
    _
  %v15 = vld [vmem:[%s0] sm:$0x1]
  %v16 = vld [vmem:[%s1] sm:$0xf]
  %v17 = vld [vmem:[%s1 + $0x4] sm:$0xf]
  %v18 = vld [vmem:[%s1 + $0x8] sm:$0xf]
  %v19 = vld [vmem:[%s1 + $0xc] sm:$0xf]
  %v20 = vld [vmem:[%s2] sm:$0x1]
  %v22 = vlaneseq
  %v23 = vshrl.u32 %v22, 7
  %v24 = vsub.s32 0, %v23
  %v25 = vrot.slane %v20, %v24
  %v31 = vunpack.c.l.b16 %v16
  %v32 = vunpack.c.l.b16 %v17
  %v33 = vunpack.c.l.b16 %v18
  %v34 = vunpack.c.l.b16 %v19
  %v35 = vpack.c.b16 %v32, %v31
  %v36 = vpack.c.b16 %v34, %v33
  %vm39 = vcmask 261120
  %v41 = vsel %vm39, %v15, 0
  %43 = vmatprep.subr.bf16.mxu0 0
  %44 = vmatpush1.bf16.msra.mxu0 %v35
  %45 = vmatprep.subr.bf16.mxu0 0
  %46 = vmatpush1.bf16.msra.mxu0 %v36
  %47 = vmatprep.subr.bf16.mxu0 0
  %48 = vmatpush1.bf16.msra.mxu0 0
  %49 = vmatprep.subr.bf16.mxu0 0
  %50 = vmatpush1.bf16.msra.mxu0 0
  %51 = vmatprep.subr.bf16.mxu0 0
  %52 = vmatpush1.bf16.msra.mxu0 0
  %53 = vmatprep.subr.bf16.mxu0 0
  %54 = vmatpush1.bf16.msra.mxu0 0
  %55 = vmatprep.subr.bf16.mxu0 0
  %56 = vmatpush1.bf16.msra.mxu0 0
  %57 = vmatprep.subr.bf16.mxu0 0
  %58 = vmatpush1.bf16.msra.mxu0 0
  %59 = vmatprep.subr.bf16.mxu0 0
  %60 = vmatpush1.bf16.msra.mxu0 0
  %61 = vmatprep.subr.bf16.mxu0 0
  %62 = vmatpush1.bf16.msra.mxu0 0
  %63 = vmatprep.subr.bf16.mxu0 0
  %64 = vmatpush1.bf16.msra.mxu0 0
  %65 = vmatprep.subr.bf16.mxu0 0
  %66 = vmatpush1.bf16.msra.mxu0 0
  %67 = vmatprep.subr.bf16.mxu0 0
  %68 = vmatpush1.bf16.msra.mxu0 0
  %69 = vmatprep.subr.bf16.mxu0 0
  %70 = vmatpush1.bf16.msra.mxu0 0
  %71 = vmatprep.subr.bf16.mxu0 0
  %72 = vmatpush1.bf16.msra.mxu0 0
  %73 = vmatprep.subr.bf16.mxu0 0
  %74 = vmatpush1.bf16.msra.mxu0 0
  %75 = vmatprep.mubr.bf16.mxu0 0
  %76 = vmatmul.mubr.bf16.gmra.mrb[0].mxu0 %v41
  %v77 = vpop.f32.mrb[0].mxu0
  %v78 = vadd.f32 %v25, %v77
  %v79 = vpop.f32.mrb[0].mxu0
  %v80 = vpop.f32.mrb[0].mxu0
  %v81 = vpop.f32.mrb[0].mxu0
  %82 = vdwg.mxu0
  %vm83 = vcmask 517120
  %84 = vst.msk [vmem:[%s3] sm:$0x3] %vm83, %v78
  // Predicated region
  $region14: #{_lambda_.4} parent=0 // pred_check
    _
  $region15: #{_lambda_.4} parent=0 // pred_check_branch
    %86 = sbr.rel (0) target = $region17
  $region16: #{_lambda_.4} parent=0 // pred_region
    _
  $region17: #{_lambda_.4} parent=0 // pred_fallthru
    _
  // Predicated region
  $region18: #{_lambda_.4} parent=0 // pred_check
    _
  $region19: #{_lambda_.4} parent=0 // pred_check_branch
    %88 = sbr.rel (0) target = $region21
  $region20: #{_lambda_.4} parent=0 // pred_region
    _
  $region21: #{_lambda_.4} parent=0 // pred_fallthru
    _

// kernel: _lambda_.5
$region0: #{_lambda_.5}
  #allocation0 [shape = 'u32[]', space=smem, size = 0x4, offset = 0x4, fixed_abs, tag = 'smem constant byte address 0x4 - core index']
  #allocation1 [shape = 'u32[144,128]{1,0:T(1,128)}', space=vmem, size = 0x12000, scoped, tag = 'internal scratch']
  %s0 = inlined_call_operand.vmem [shape: bf16[2,3,3,16], index: 0, kind: input, shape index: {}, may-alias: {0,1}]
  %s1 = inlined_call_operand.vmem [shape: bf16[2,3,3,16], index: 1, kind: input, shape index: {}, may-alias: {0,1}]
  %s2 = inlined_call_operand.vmem [shape: bf16[4,16,128], index: 2, kind: input, shape index: {}]
  %s3 = inlined_call_operand.vmem [shape: bf16[2,2,2,128], index: 3, kind: output, shape index: {0}]
  %s4 = inlined_call_operand.vmem [shape: f32[2,2,128], index: 4, kind: output, shape index: {1}]
  %5 = xla_tuple %s3, %s4
  %s6 = sld [smem:[#allocation0]]
  $region57: #{_lambda_.5} parent=0
    _
  %s8 = ssub.s32 1, %s6
  %s9 = scalar_select 0, %s8, %s6
  loop: start=0, step=1, limit=6
  $region2: #{_lambda_.5} parent=0 // loop_pre_header
    _
  $region3: #{_lambda_.5} parent=0 // loop_header
    %s11 = sphi 0, %s15
    %p12 = scmp.ge.s32.totalorder %s11, 6
    %s18 = sphi 0, %s30
    %s19 = sphi 0, %s26
    %s20 = sphi 0, %s18
    %s21 = sphi 0, %s19
    %s22 = sphi 0, %s20
    %s23 = sphi 0, %s21
    %s35 = sphi 0, %s37
    %s38 = sphi 0, %s35
    %s39 = sphi 0, %s38
    %s55 = sphi 0, %s39
    %s65 = sphi 0, %s67
    %s68 = sphi 0, %s65
    %s69 = sphi 0, %s68
    %s85 = sphi 0, %s69
    %s89 = sphi 0, %s89
    %s91 = sphi 0, %s89
    %s92 = sphi 0, %s91
    %s106 = sphi 0, %s92
    %s114 = sphi 0, %s116
    %s117 = sphi 0, %s114
    %s118 = sphi 0, %s117
    %s134 = sphi 0, %s118
    %s140 = sphi 0, %s142
    %s143 = sphi 0, %s140
    %s144 = sphi 0, %s143
    %s160 = sphi 0, %s144
  $region4: #{_lambda_.5} parent=0 // loop_header_branch
    %14 = sbr.rel (%p12) target = $region8
  $region5: #{_lambda_.5} parent=0 // loop_body
    %s16 = ssub.s32 %s11, 1
    %s17 = ssub.s32 %s11, 2
    %s24 = sadd.s32 1, %s19
    %p25 = scmp.ge.s32.totalorder %s24, 2
    %s26 = scalar_select %p25, 0, %s24
    %s27 = sadd.s32 1, %s18
    %s28 = scalar_select %p25, %s27, %s18
    %p29 = scmp.ge.s32.totalorder %s28, 2
    %s30 = scalar_select %p29, 0, %s28
    %s31 = ssub.s32 %s18, %s30
    %s32 = ssub.s32 %s19, %s26
    %s33 = sor.u32 %s31, %s32
    %p34 = scmp.eq.s32.totalorder %s33, 0
    %s36 = sadd.s32 %s35, 1
    %s37 = scalar_select %p34, %s35, %s36
    %p40 = pneg %p34
    %p41 = scmp.eq.s32.totalorder %s11, 3
    %p42 = por %p40, %p41
    %p43 = scmp.ne.s32.totalorder %s35, %s38
    %p44 = scmp.eq.s32.totalorder %s11, 0
    %p45 = por %p43, %p44
    %p46 = scmp.ne.s32.totalorder %s35, %s38
    %p47 = scmp.eq.s32.totalorder %s16, 3
    %p48 = por %p46, %p47
    %p49 = scmp.ne.s32.totalorder %s38, %s39
    %p50 = scmp.eq.s32.totalorder %s16, 0
    %p51 = por %p49, %p50
    %p52 = scmp.ne.s32.totalorder %s38, %s39
    %p53 = scmp.eq.s32.totalorder %s17, 3
    %p54 = por %p52, %p53
    %p56 = scmp.ne.s32.totalorder %s39, %s55
    %p57 = scmp.eq.s32.totalorder %s17, 0
    %p58 = por %p56, %p57
    %s59 = sadd.s32 %s19, 1
    %s60 = sadd.s32 %s26, 1
    %s61 = ssub.s32 %s18, %s30
    %s62 = ssub.s32 %s59, %s60
    %s63 = sor.u32 %s61, %s62
    %p64 = scmp.eq.s32.totalorder %s63, 0
    %s66 = sadd.s32 %s65, 1
    %s67 = scalar_select %p64, %s65, %s66
    %p70 = pneg %p64
    %p71 = scmp.eq.s32.totalorder %s11, 3
    %p72 = por %p70, %p71
    %p73 = scmp.ne.s32.totalorder %s65, %s68
    %p74 = scmp.eq.s32.totalorder %s11, 0
    %p75 = por %p73, %p74
    %p76 = scmp.ne.s32.totalorder %s65, %s68
    %p77 = scmp.eq.s32.totalorder %s16, 3
    %p78 = por %p76, %p77
    %p79 = scmp.ne.s32.totalorder %s68, %s69
    %p80 = scmp.eq.s32.totalorder %s16, 0
    %p81 = por %p79, %p80
    %p82 = scmp.ne.s32.totalorder %s68, %s69
    %p83 = scmp.eq.s32.totalorder %s17, 3
    %p84 = por %p82, %p83
    %p86 = scmp.ne.s32.totalorder %s69, %s85
    %p87 = scmp.eq.s32.totalorder %s17, 0
    %p88 = por %p86, %p87
    %s90 = sadd.s32 %s89, 1
    %p93 = scmp.eq.s32.totalorder %s11, 3
    %p94 = scmp.ne.s32.totalorder %s89, %s91
    %p95 = scmp.eq.s32.totalorder %s11, 0
    %p96 = por %p94, %p95
    %p97 = scmp.ne.s32.totalorder %s89, %s91
    %p98 = scmp.eq.s32.totalorder %s16, 3
    %p99 = por %p97, %p98
    %p100 = scmp.ne.s32.totalorder %s91, %s92
    %p101 = scmp.eq.s32.totalorder %s16, 0
    %p102 = por %p100, %p101
    %p103 = scmp.ne.s32.totalorder %s91, %s92
    %p104 = scmp.eq.s32.totalorder %s17, 3
    %p105 = por %p103, %p104
    %p107 = scmp.ne.s32.totalorder %s92, %s106
    %p108 = scmp.eq.s32.totalorder %s17, 0
    %p109 = por %p107, %p108
    %s110 = ssub.s32 %s18, %s30
    %s111 = ssub.s32 %s19, %s26
    %s112 = sor.u32 %s110, %s111
    %p113 = scmp.eq.s32.totalorder %s112, 0
    %s115 = sadd.s32 %s114, 1
    %s116 = scalar_select %p113, %s114, %s115
    %p119 = pneg %p113
    %p120 = scmp.eq.s32.totalorder %s11, 3
    %p121 = por %p119, %p120
    %p122 = scmp.ne.s32.totalorder %s114, %s117
    %p123 = scmp.eq.s32.totalorder %s11, 0
    %p124 = por %p122, %p123
    %p125 = scmp.ne.s32.totalorder %s114, %s117
    %p126 = scmp.eq.s32.totalorder %s16, 3
    %p127 = por %p125, %p126
    %p128 = scmp.ne.s32.totalorder %s117, %s118
    %p129 = scmp.eq.s32.totalorder %s16, 0
    %p130 = por %p128, %p129
    %p131 = scmp.ne.s32.totalorder %s117, %s118
    %p132 = scmp.eq.s32.totalorder %s17, 3
    %p133 = por %p131, %p132
    %p135 = scmp.ne.s32.totalorder %s118, %s134
    %p136 = scmp.eq.s32.totalorder %s17, 0
    %p137 = por %p135, %p136
    %s138 = ssub.s32 %s18, %s30
    %p139 = scmp.eq.s32.totalorder %s138, 0
    %s141 = sadd.s32 %s140, 1
    %s142 = scalar_select %p139, %s140, %s141
    %p145 = pneg %p139
    %p146 = scmp.eq.s32.totalorder %s11, 3
    %p147 = por %p145, %p146
    %p148 = scmp.ne.s32.totalorder %s140, %s143
    %p149 = scmp.eq.s32.totalorder %s11, 0
    %p150 = por %p148, %p149
    %p151 = scmp.ne.s32.totalorder %s140, %s143
    %p152 = scmp.eq.s32.totalorder %s16, 3
    %p153 = por %p151, %p152
    %p154 = scmp.ne.s32.totalorder %s143, %s144
    %p155 = scmp.eq.s32.totalorder %s16, 0
    %p156 = por %p154, %p155
    %p157 = scmp.ne.s32.totalorder %s143, %s144
    %p158 = scmp.eq.s32.totalorder %s17, 3
    %p159 = por %p157, %p158
    %p161 = scmp.ne.s32.totalorder %s144, %s160
    %p162 = scmp.eq.s32.totalorder %s17, 0
    %p163 = por %p161, %p162
    %p164 = scmp.le.s32.totalorder 1, %s11
    %p165 = scmp.lt.s32.totalorder %s11, 5
    %p166 = pnand %p164, %p165
    %p167 = pneg %p166
    // Predicated region
    $region9: #{_lambda_.5} parent=5 // pred_check
      _
    $region10: #{_lambda_.5} parent=5 // pred_check_branch
      %169 = sbr.rel (%p166) target = $region12
    $region11: #{_lambda_.5} parent=5 // pred_region
      %s170 = ssub.s32 %s11, 1
      // Predicated region
      $region13: #{_lambda_.5} parent=11 // pred_check
        %p171 = pneg %p102
      $region14: #{_lambda_.5} parent=11 // pred_check_branch
        %173 = sbr.rel (%p171) target = $region16
      $region15: #{_lambda_.5} parent=11 // pred_region
        _
      $region16: #{_lambda_.5} parent=11 // pred_fallthru
        _
    $region12: #{_lambda_.5} parent=5 // pred_fallthru
      _
    %p174 = scmp.lt.s32.totalorder %s11, 4
    // Predicated region
    $region17: #{_lambda_.5} parent=5 // pred_check
      %p175 = pneg %p174
    $region18: #{_lambda_.5} parent=5 // pred_check_branch
      %177 = sbr.rel (%p175) target = $region20
    $region19: #{_lambda_.5} parent=5 // pred_region
      // Predicated region
      $region21: #{_lambda_.5} parent=19 // pred_check
        %p178 = pneg %p45
      $region22: #{_lambda_.5} parent=19 // pred_check_branch
        %180 = sbr.rel (%p178) target = $region24
      $region23: #{_lambda_.5} parent=19 // pred_region
        %p181 = scmp.lt.s32.totalorder %s18, 1
        %s182 = scalar_select %p181, %s18, 1
        %p183 = scmp.lt.s32.totalorder %s19, 2
        %s184 = scalar_select %p183, %s19, 2
        %s185 = smul.addr %s182, 3
        %s186 = sadd.s32 %s184, %s185
        %s187 = smul.addr %s186, 2
        %s188 = scalar_lea.vmem %s0, %s187
      $region24: #{_lambda_.5} parent=19 // pred_fallthru
        _
      // Predicated region
      $region25: #{_lambda_.5} parent=19 // pred_check
        %p189 = pneg %p75
      $region26: #{_lambda_.5} parent=19 // pred_check_branch
        %191 = sbr.rel (%p189) target = $region28
      $region27: #{_lambda_.5} parent=19 // pred_region
        %s192 = sadd.s32 %s19, 1
        %p193 = scmp.lt.s32.totalorder %s18, 1
        %s194 = scalar_select %p193, %s18, 1
        %p195 = scmp.lt.s32.totalorder %s192, 2
        %s196 = scalar_select %p195, %s192, 2
        %s197 = smul.addr %s194, 3
        %s198 = sadd.s32 %s196, %s197
        %s199 = smul.addr %s198, 2
        %s200 = scalar_lea.vmem %s1, %s199
        %s201 = sadd.s32 %s19, 1
      $region28: #{_lambda_.5} parent=19 // pred_fallthru
        _
    $region20: #{_lambda_.5} parent=5 // pred_fallthru
      _
    %p202 = scmp.le.s32.totalorder 1, %s11
    %p203 = scmp.lt.s32.totalorder %s11, 5
    %p204 = pnand %p202, %p203
    %p205 = pneg %p204
    // Predicated region
    $region29: #{_lambda_.5} parent=5 // pred_check
      _
    $region30: #{_lambda_.5} parent=5 // pred_check_branch
      %207 = sbr.rel (%p204) target = $region32
    $region31: #{_lambda_.5} parent=5 // pred_region
      %s208 = ssub.s32 %s11, 1
      %p209 = scmp.lt.s32.totalorder %s20, 1
      %s210 = scalar_select %p209, %s20, 1
      %p211 = scmp.lt.s32.totalorder %s21, 2
      %s212 = scalar_select %p211, %s21, 2
      %s213 = smul.addr %s210, 3
      %s214 = sadd.s32 %s212, %s213
      %s215 = smul.addr %s214, 2
      %s216 = scalar_lea.vmem %s0, %s215
      %p217 = pneg %p51
      %p218 = pneg %p48
      %s219 = sadd.s32 %s21, 1
      %p220 = scmp.lt.s32.totalorder %s20, 1
      %s221 = scalar_select %p220, %s20, 1
      %p222 = scmp.lt.s32.totalorder %s219, 2
      %s223 = scalar_select %p222, %s219, 2
      %s224 = smul.addr %s221, 3
      %s225 = sadd.s32 %s223, %s224
      %s226 = smul.addr %s225, 2
      %s227 = scalar_lea.vmem %s1, %s226
      %p228 = pneg %p81
      %p229 = pneg %p78
      %p230 = pneg %p102
      %p231 = pneg %p99
      %p232 = pneg %p130
      %p233 = pneg %p127
      %p234 = scmp.lt.s32.totalorder %s20, 1
      %s235 = scalar_select %p234, %s20, 1
      %p236 = scmp.lt.s32.totalorder %s21, 1
      %s237 = scalar_select %p236, %s21, 1
      %s238 = smul.addr %s235, 2
      %s239 = sadd.s32 %s237, %s238
      %s240 = scalar_lea.vmem %s3, %s239
      %p241 = pneg %p156
      %p242 = pneg %p153
      %p243 = scmp.lt.s32.totalorder %s20, 1
      %s244 = scalar_select %p243, %s20, 1
      %s245 = smul.addr %s244, 2
      %s246 = scalar_lea.vmem %s4, %s245
      %p247 = scmp.lt.s32.totalorder %s20, 1
      %s248 = scalar_select %p247, %s20, 1
      %p249 = scmp.lt.s32.totalorder %s21, 2
      %s250 = scalar_select %p249, %s21, 2
      %s251 = smul.addr %s248, 3
      %s252 = sadd.s32 %s250, %s251
      %s253 = smul.addr %s252, 2
      %s254 = scalar_lea.vmem %s0, %s253
      %s255 = sadd.s32 %s21, 1
      %p256 = scmp.lt.s32.totalorder %s20, 1
      %s257 = scalar_select %p256, %s20, 1
      %p258 = scmp.lt.s32.totalorder %s255, 2
      %s259 = scalar_select %p258, %s255, 2
      %s260 = smul.addr %s257, 3
      %s261 = sadd.s32 %s259, %s260
      %s262 = smul.addr %s261, 2
      %s263 = scalar_lea.vmem %s1, %s262
      %s264 = sadd.s32 %s21, 1
      %p265 = scmp.lt.s32.totalorder %s20, 1
      %s266 = scalar_select %p265, %s20, 1
      %p267 = scmp.lt.s32.totalorder %s21, 1
      %s268 = scalar_select %p267, %s21, 1
      %s269 = smul.addr %s266, 2
      %s270 = sadd.s32 %s268, %s269
      %s271 = scalar_lea.vmem %s3, %s270
      %p272 = scmp.lt.s32.totalorder %s20, 1
      %s273 = scalar_select %p272, %s20, 1
      %s274 = smul.addr %s273, 2
      %s275 = scalar_lea.vmem %s4, %s274
      %v277 = vld [vmem:[%s254] sm:$0x3]
      %v278 = vld [vmem:[%s263] sm:$0x3]
      %v279 = vld [vmem:[%s2] sm:$0xf]
      %v280 = vld [vmem:[%s2 + $0x4] sm:$0xf]
      %s281 = scalar_lea.vmem %s2, 8
      %v282 = vld [vmem:[%s281] sm:$0xf]
      %v283 = vld [vmem:[%s281 + $0x4] sm:$0xf]
      %v286 = vunpack.c.l.s4 1983009808
      %v287 = vunpack.c.0.s8 %v286
      %v288 = vlaneseq
      %v289 = vshrl.u32 %v288, 7
      %v290 = vsub.s32 %v287, %v289
      %v291 = vrot.slane %v277, %v290
      %v293 = vshrl.u32 %v291, 16
      %v295 = vshll.u32 %v291, 16
      %v297 = vrot.slane %v295, 1
      %v298 = vor.u32 %v293, %v297
      %v301 = vunpack.c.l.b16 %v282
      %v302 = vunpack.c.l.b16 %v283
      %v303 = vpack.c.b16 %v302, %v301
      %vm305 = vcmask 130048
      %v307 = vsel %vm305, %v298, 0
      %309 = vmatprep.subr.bf16.mxu0 0
      %310 = vmatpush1.bf16.msra.mxu0 %v303
      %311 = vmatprep.subr.bf16.mxu0 0
      %312 = vmatpush1.bf16.msra.mxu0 0
      %313 = vmatprep.subr.bf16.mxu0 0
      %314 = vmatpush1.bf16.msra.mxu0 0
      %315 = vmatprep.subr.bf16.mxu0 0
      %316 = vmatpush1.bf16.msra.mxu0 0
      %317 = vmatprep.subr.bf16.mxu0 0
      %318 = vmatpush1.bf16.msra.mxu0 0
      %319 = vmatprep.subr.bf16.mxu0 0
      %320 = vmatpush1.bf16.msra.mxu0 0
      %321 = vmatprep.subr.bf16.mxu0 0
      %322 = vmatpush1.bf16.msra.mxu0 0
      %323 = vmatprep.subr.bf16.mxu0 0
      %324 = vmatpush1.bf16.msra.mxu0 0
      %325 = vmatprep.subr.bf16.mxu0 0
      %326 = vmatpush1.bf16.msra.mxu0 0
      %327 = vmatprep.subr.bf16.mxu0 0
      %328 = vmatpush1.bf16.msra.mxu0 0
      %329 = vmatprep.subr.bf16.mxu0 0
      %330 = vmatpush1.bf16.msra.mxu0 0
      %331 = vmatprep.subr.bf16.mxu0 0
      %332 = vmatpush1.bf16.msra.mxu0 0
      %333 = vmatprep.subr.bf16.mxu0 0
      %334 = vmatpush1.bf16.msra.mxu0 0
      %335 = vmatprep.subr.bf16.mxu0 0
      %336 = vmatpush1.bf16.msra.mxu0 0
      %337 = vmatprep.subr.bf16.mxu0 0
      %338 = vmatpush1.bf16.msra.mxu0 0
      %339 = vmatprep.subr.bf16.mxu0 0
      %340 = vmatpush1.bf16.msra.mxu0 0
      %341 = vmatprep.mubr.bf16.mxu0 0
      %342 = vmatmul.mubr.bf16.gmra.mrb[0].mxu0 %v307
      %v343 = vpop.f32.mrb[0].mxu0
      %v344 = vadd.f32 0.0, %v343
      %v345 = vpop.f32.mrb[0].mxu0
      %v346 = vpop.f32.mrb[0].mxu0
      %v347 = vpop.f32.mrb[0].mxu0
      %348 = vdwg.mxu0
      %v351 = vunpack.c.l.b16 %v279
      %v352 = vunpack.c.l.b16 %v280
      %v353 = vpack.c.b16 %v352, %v351
      %v356 = vsel %vm305, %v277, 0
      %358 = vmatprep.subr.bf16.mxu0 0
      %359 = vmatpush1.bf16.msra.mxu0 %v353
      %360 = vmatprep.subr.bf16.mxu0 0
      %361 = vmatpush1.bf16.msra.mxu0 0
      %362 = vmatprep.subr.bf16.mxu0 0
      %363 = vmatpush1.bf16.msra.mxu0 0
      %364 = vmatprep.subr.bf16.mxu0 0
      %365 = vmatpush1.bf16.msra.mxu0 0
      %366 = vmatprep.subr.bf16.mxu0 0
      %367 = vmatpush1.bf16.msra.mxu0 0
      %368 = vmatprep.subr.bf16.mxu0 0
      %369 = vmatpush1.bf16.msra.mxu0 0
      %370 = vmatprep.subr.bf16.mxu0 0
      %371 = vmatpush1.bf16.msra.mxu0 0
      %372 = vmatprep.subr.bf16.mxu0 0
      %373 = vmatpush1.bf16.msra.mxu0 0
      %374 = vmatprep.subr.bf16.mxu0 0
      %375 = vmatpush1.bf16.msra.mxu0 0
      %376 = vmatprep.subr.bf16.mxu0 0
      %377 = vmatpush1.bf16.msra.mxu0 0
      %378 = vmatprep.subr.bf16.mxu0 0
      %379 = vmatpush1.bf16.msra.mxu0 0
      %380 = vmatprep.subr.bf16.mxu0 0
      %381 = vmatpush1.bf16.msra.mxu0 0
      %382 = vmatprep.subr.bf16.mxu0 0
      %383 = vmatpush1.bf16.msra.mxu0 0
      %384 = vmatprep.subr.bf16.mxu0 0
      %385 = vmatpush1.bf16.msra.mxu0 0
      %386 = vmatprep.subr.bf16.mxu0 0
      %387 = vmatpush1.bf16.msra.mxu0 0
      %388 = vmatprep.subr.bf16.mxu0 0
      %389 = vmatpush1.bf16.msra.mxu0 0
      %390 = vmatprep.mubr.bf16.mxu0 0
      %391 = vmatmul.mubr.bf16.gmra.mrb[0].mxu0 %v356
      %v392 = vpop.f32.mrb[0].mxu0
      %v393 = vadd.f32 %v344, %v392
      %v394 = vpop.f32.mrb[0].mxu0
      %v395 = vpop.f32.mrb[0].mxu0
      %v396 = vpop.f32.mrb[0].mxu0
      %397 = vdwg.mxu0
      %s398 = scalar_lea.vmem %s2, 16
      %v399 = vld [vmem:[%s398] sm:$0xf]
      %v400 = vld [vmem:[%s398 + $0x4] sm:$0xf]
      %v403 = vunpack.c.l.b16 %v399
      %v404 = vunpack.c.l.b16 %v400
      %v405 = vpack.c.b16 %v404, %v403
      %v408 = vsel %vm305, %v278, 0
      %410 = vmatprep.subr.bf16.mxu0 0
      %411 = vmatpush1.bf16.msra.mxu0 %v405
      %412 = vmatprep.subr.bf16.mxu0 0
      %413 = vmatpush1.bf16.msra.mxu0 0
      %414 = vmatprep.subr.bf16.mxu0 0
      %415 = vmatpush1.bf16.msra.mxu0 0
      %416 = vmatprep.subr.bf16.mxu0 0
      %417 = vmatpush1.bf16.msra.mxu0 0
      %418 = vmatprep.subr.bf16.mxu0 0
      %419 = vmatpush1.bf16.msra.mxu0 0
      %420 = vmatprep.subr.bf16.mxu0 0
      %421 = vmatpush1.bf16.msra.mxu0 0
      %422 = vmatprep.subr.bf16.mxu0 0
      %423 = vmatpush1.bf16.msra.mxu0 0
      %424 = vmatprep.subr.bf16.mxu0 0
      %425 = vmatpush1.bf16.msra.mxu0 0
      %426 = vmatprep.subr.bf16.mxu0 0
      %427 = vmatpush1.bf16.msra.mxu0 0
      %428 = vmatprep.subr.bf16.mxu0 0
      %429 = vmatpush1.bf16.msra.mxu0 0
      %430 = vmatprep.subr.bf16.mxu0 0
      %431 = vmatpush1.bf16.msra.mxu0 0
      %432 = vmatprep.subr.bf16.mxu0 0
      %433 = vmatpush1.bf16.msra.mxu0 0
      %434 = vmatprep.subr.bf16.mxu0 0
      %435 = vmatpush1.bf16.msra.mxu0 0
      %436 = vmatprep.subr.bf16.mxu0 0
      %437 = vmatpush1.bf16.msra.mxu0 0
      %438 = vmatprep.subr.bf16.mxu0 0
      %439 = vmatpush1.bf16.msra.mxu0 0
      %440 = vmatprep.subr.bf16.mxu0 0
      %441 = vmatpush1.bf16.msra.mxu0 0
      %442 = vmatprep.mubr.bf16.mxu0 0
      %443 = vmatmul.mubr.bf16.gmra.mrb[0].mxu0 %v408
      %v444 = vpop.f32.mrb[0].mxu0
      %v445 = vadd.f32 0.0, %v444
      %v446 = vpop.f32.mrb[0].mxu0
      %v447 = vpop.f32.mrb[0].mxu0
      %v448 = vpop.f32.mrb[0].mxu0
      %449 = vdwg.mxu0
      %v450 = vadd.f32 %v393, %v445
      %s451 = scalar_lea.vmem %s2, 24
      %v452 = vld [vmem:[%s451] sm:$0xf]
      %v453 = vld [vmem:[%s451 + $0x4] sm:$0xf]
      %v456 = vunpack.c.l.s4 1983009808
      %v457 = vunpack.c.0.s8 %v456
      %v458 = vlaneseq
      %v459 = vshrl.u32 %v458, 7
      %v460 = vsub.s32 %v457, %v459
      %v461 = vrot.slane %v278, %v460
      %v463 = vshrl.u32 %v461, 16
      %v465 = vshll.u32 %v461, 16
      %v467 = vrot.slane %v465, 1
      %v468 = vor.u32 %v463, %v467
      %v471 = vunpack.c.l.b16 %v452
      %v472 = vunpack.c.l.b16 %v453
      %v473 = vpack.c.b16 %v472, %v471
      %v476 = vsel %vm305, %v468, 0
      %478 = vmatprep.subr.bf16.mxu0 0
      %479 = vmatpush1.bf16.msra.mxu0 %v473
      %480 = vmatprep.subr.bf16.mxu0 0
      %481 = vmatpush1.bf16.msra.mxu0 0
      %482 = vmatprep.subr.bf16.mxu0 0
      %483 = vmatpush1.bf16.msra.mxu0 0
      %484 = vmatprep.subr.bf16.mxu0 0
      %485 = vmatpush1.bf16.msra.mxu0 0
      %486 = vmatprep.subr.bf16.mxu0 0
      %487 = vmatpush1.bf16.msra.mxu0 0
      %488 = vmatprep.subr.bf16.mxu0 0
      %489 = vmatpush1.bf16.msra.mxu0 0
      %490 = vmatprep.subr.bf16.mxu0 0
      %491 = vmatpush1.bf16.msra.mxu0 0
      %492 = vmatprep.subr.bf16.mxu0 0
      %493 = vmatpush1.bf16.msra.mxu0 0
      %494 = vmatprep.subr.bf16.mxu0 0
      %495 = vmatpush1.bf16.msra.mxu0 0
      %496 = vmatprep.subr.bf16.mxu0 0
      %497 = vmatpush1.bf16.msra.mxu0 0
      %498 = vmatprep.subr.bf16.mxu0 0
      %499 = vmatpush1.bf16.msra.mxu0 0
      %500 = vmatprep.subr.bf16.mxu0 0
      %501 = vmatpush1.bf16.msra.mxu0 0
      %502 = vmatprep.subr.bf16.mxu0 0
      %503 = vmatpush1.bf16.msra.mxu0 0
      %504 = vmatprep.subr.bf16.mxu0 0
      %505 = vmatpush1.bf16.msra.mxu0 0
      %506 = vmatprep.subr.bf16.mxu0 0
      %507 = vmatpush1.bf16.msra.mxu0 0
      %508 = vmatprep.subr.bf16.mxu0 0
      %509 = vmatpush1.bf16.msra.mxu0 0
      %510 = vmatprep.mubr.bf16.mxu0 0
      %511 = vmatmul.mubr.bf16.gmra.mrb[0].mxu0 %v476
      %v512 = vpop.f32.mrb[0].mxu0
      %v513 = vadd.f32 0.0, %v512
      %v514 = vpop.f32.mrb[0].mxu0
      %v515 = vpop.f32.mrb[0].mxu0
      %v516 = vpop.f32.mrb[0].mxu0
      %517 = vdwg.mxu0
      %v518 = vadd.f32 %v450, %v513
      %v519 = vpack.c.bf16 %v518, %v518
      %520 = vst [vmem:[%s271] sm:$0x1] %v519
      %p521 = scmp.eq.s32.totalorder %s21, 0
      // Predicated region
      $region33: #{_lambda_.5} parent=31 // pred_check
        %p522 = pneg %p521
      $region34: #{_lambda_.5} parent=31 // pred_check_branch
        %524 = sbr.rel (%p522) target = $region36
      $region35: #{_lambda_.5} parent=31 // pred_region
        %525 = vst [vmem:[%s275] sm:$0x3] 0.0
      $region36: #{_lambda_.5} parent=31 // pred_fallthru
        _
      %v526 = vld [vmem:[%s275] sm:$0x1]
      %vm527 = vcmask 1041408
      %v528 = vsel %vm527, %v518, 0.0
      %v529 = vrot.slane %v528, 4
      %v530 = vadd.f32 %v528, %v529
      %v531 = vrot.slane %v530, 2
      %v532 = vadd.f32 %v530, %v531
      %v533 = vrot.slane %v532, 1
      %v534 = vadd.f32 %v532, %v533
      %v535 = vadd.f32 %v526, %v534
      %536 = vst [vmem:[%s275] sm:$0x1] %v535
      %v537 = vld [vmem:[%s275 + $0x1] sm:$0x1]
      %v538 = vmul.f32 %v518, %v518
      %v539 = vsel %vm527, %v538, 0.0
      %v540 = vrot.slane %v539, 4
      %v541 = vadd.f32 %v539, %v540
      %v542 = vrot.slane %v541, 2
      %v543 = vadd.f32 %v541, %v542
      %v544 = vrot.slane %v543, 1
      %v545 = vadd.f32 %v543, %v544
      %v546 = vadd.f32 %v537, %v545
      %547 = vst [vmem:[%s275 + $0x1] sm:$0x1] %v546
      %p548 = scmp.lt.s32.totalorder %s20, 1
      %s549 = scalar_select %p548, %s20, 1
      %p550 = scmp.lt.s32.totalorder %s21, 1
      %s551 = scalar_select %p550, %s21, 1
      %s552 = smul.addr %s549, 2
      %s553 = sadd.s32 %s551, %s552
      %s554 = scalar_lea.vmem %s3, %s553
      %p555 = scmp.lt.s32.totalorder %s20, 1
      %s556 = scalar_select %p555, %s20, 1
      %s557 = smul.addr %s556, 2
      %s558 = scalar_lea.vmem %s4, %s557
      // Predicated region
      $region37: #{_lambda_.5} parent=31 // pred_check
        %p559 = pneg %p127
      $region38: #{_lambda_.5} parent=31 // pred_check_branch
        %561 = sbr.rel (%p559) target = $region40
      $region39: #{_lambda_.5} parent=31 // pred_region
        _
      $region40: #{_lambda_.5} parent=31 // pred_fallthru
        _
      // Predicated region
      $region41: #{_lambda_.5} parent=31 // pred_check
        %p562 = pneg %p153
      $region42: #{_lambda_.5} parent=31 // pred_check_branch
        %564 = sbr.rel (%p562) target = $region44
      $region43: #{_lambda_.5} parent=31 // pred_region
        _
      $region44: #{_lambda_.5} parent=31 // pred_fallthru
        _
    $region32: #{_lambda_.5} parent=5 // pred_fallthru
      _
    %p565 = scmp.le.s32.totalorder 2, %s11
    // Predicated region
    $region45: #{_lambda_.5} parent=5 // pred_check
      %p566 = pneg %p565
    $region46: #{_lambda_.5} parent=5 // pred_check_branch
      %568 = sbr.rel (%p566) target = $region48
    $region47: #{_lambda_.5} parent=5 // pred_region
      %s569 = ssub.s32 %s11, 2
      // Predicated region
      $region49: #{_lambda_.5} parent=47 // pred_check
        %p570 = pneg %p133
      $region50: #{_lambda_.5} parent=47 // pred_check_branch
        %572 = sbr.rel (%p570) target = $region52
      $region51: #{_lambda_.5} parent=47 // pred_region
        %p573 = scmp.lt.s32.totalorder %s22, 1
        %s574 = scalar_select %p573, %s22, 1
        %p575 = scmp.lt.s32.totalorder %s23, 1
        %s576 = scalar_select %p575, %s23, 1
        %s577 = smul.addr %s574, 2
        %s578 = sadd.s32 %s576, %s577
        %s579 = scalar_lea.vmem %s3, %s578
      $region52: #{_lambda_.5} parent=47 // pred_fallthru
        _
      // Predicated region
      $region53: #{_lambda_.5} parent=47 // pred_check
        %p580 = pneg %p159
      $region54: #{_lambda_.5} parent=47 // pred_check_branch
        %582 = sbr.rel (%p580) target = $region56
      $region55: #{_lambda_.5} parent=47 // pred_region
        %p583 = scmp.lt.s32.totalorder %s22, 1
        %s584 = scalar_select %p583, %s22, 1
        %s585 = smul.addr %s584, 2
        %s586 = scalar_lea.vmem %s4, %s585
      $region56: #{_lambda_.5} parent=47 // pred_fallthru
        _
    $region48: #{_lambda_.5} parent=5 // pred_fallthru
      _
  $region6: #{_lambda_.5} parent=0 // loop_footer
    %s15 = sadd.s32 1, %s11
  $region7: #{_lambda_.5} parent=0 // loop_footer_branch
    %10 = sbr.rel target = $region3
  $region8: #{_lambda_.5} parent=0 // loop_exit
    _

// kernel: _lambda_.6
$region0: #{_lambda_.6}
  #allocation0 [shape = 'u32[]', space=smem, size = 0x4, offset = 0x4, fixed_abs, tag = 'smem constant byte address 0x4 - core index']
  #allocation1 [shape = 'u32[144,128]{1,0:T(1,128)}', space=vmem, size = 0x12000, scoped, tag = 'internal scratch']
  %s0 = inlined_call_operand.vmem [shape: bf16[2,5,5,8], index: 0, kind: input, shape index: {}, may-alias: {0,1}]
  %s1 = inlined_call_operand.vmem [shape: bf16[2,5,5,8], index: 1, kind: input, shape index: {}, may-alias: {0,1}]
  %s2 = inlined_call_operand.vmem [shape: bf16[4,8,128], index: 2, kind: input, shape index: {}]
  %s3 = inlined_call_operand.vmem [shape: bf16[2,4,4,128], index: 3, kind: output, shape index: {0}]
  %s4 = inlined_call_operand.vmem [shape: f32[2,2,128], index: 4, kind: output, shape index: {1}]
  %5 = xla_tuple %s3, %s4
  %s6 = sld [smem:[#allocation0]]
  $region57: #{_lambda_.6} parent=0
    _
  %s8 = ssub.s32 1, %s6
  %s9 = scalar_select 0, %s8, %s6
  loop: start=0, step=1, limit=10
  $region2: #{_lambda_.6} parent=0 // loop_pre_header
    _
  $region3: #{_lambda_.6} parent=0 // loop_header
    %s11 = sphi 0, %s15
    %p12 = scmp.ge.s32.totalorder %s11, 10
    %s18 = sphi 0, %s30
    %s19 = sphi 0, %s26
    %s20 = sphi 0, %s18
    %s21 = sphi 0, %s19
    %s22 = sphi 0, %s20
    %s23 = sphi 0, %s21
    %s35 = sphi 0, %s37
    %s38 = sphi 0, %s35
    %s39 = sphi 0, %s38
    %s55 = sphi 0, %s39
    %s65 = sphi 0, %s67
    %s68 = sphi 0, %s65
    %s69 = sphi 0, %s68
    %s85 = sphi 0, %s69
    %s89 = sphi 0, %s89
    %s91 = sphi 0, %s89
    %s92 = sphi 0, %s91
    %s106 = sphi 0, %s92
    %s114 = sphi 0, %s116
    %s117 = sphi 0, %s114
    %s118 = sphi 0, %s117
    %s134 = sphi 0, %s118
    %s140 = sphi 0, %s142
    %s143 = sphi 0, %s140
    %s144 = sphi 0, %s143
    %s160 = sphi 0, %s144
  $region4: #{_lambda_.6} parent=0 // loop_header_branch
    %14 = sbr.rel (%p12) target = $region8
  $region5: #{_lambda_.6} parent=0 // loop_body
    %s16 = ssub.s32 %s11, 1
    %s17 = ssub.s32 %s11, 2
    %s24 = sadd.s32 1, %s19
    %p25 = scmp.ge.s32.totalorder %s24, 4
    %s26 = scalar_select %p25, 0, %s24
    %s27 = sadd.s32 1, %s18
    %s28 = scalar_select %p25, %s27, %s18
    %p29 = scmp.ge.s32.totalorder %s28, 2
    %s30 = scalar_select %p29, 0, %s28
    %s31 = ssub.s32 %s18, %s30
    %s32 = ssub.s32 %s19, %s26
    %s33 = sor.u32 %s31, %s32
    %p34 = scmp.eq.s32.totalorder %s33, 0
    %s36 = sadd.s32 %s35, 1
    %s37 = scalar_select %p34, %s35, %s36
    %p40 = pneg %p34
    %p41 = scmp.eq.s32.totalorder %s11, 7
    %p42 = por %p40, %p41
    %p43 = scmp.ne.s32.totalorder %s35, %s38
    %p44 = scmp.eq.s32.totalorder %s11, 0
    %p45 = por %p43, %p44
    %p46 = scmp.ne.s32.totalorder %s35, %s38
    %p47 = scmp.eq.s32.totalorder %s16, 7
    %p48 = por %p46, %p47
    %p49 = scmp.ne.s32.totalorder %s38, %s39
    %p50 = scmp.eq.s32.totalorder %s16, 0
    %p51 = por %p49, %p50
    %p52 = scmp.ne.s32.totalorder %s38, %s39
    %p53 = scmp.eq.s32.totalorder %s17, 7
    %p54 = por %p52, %p53
    %p56 = scmp.ne.s32.totalorder %s39, %s55
    %p57 = scmp.eq.s32.totalorder %s17, 0
    %p58 = por %p56, %p57
    %s59 = sadd.s32 %s19, 1
    %s60 = sadd.s32 %s26, 1
    %s61 = ssub.s32 %s18, %s30
    %s62 = ssub.s32 %s59, %s60
    %s63 = sor.u32 %s61, %s62
    %p64 = scmp.eq.s32.totalorder %s63, 0
    %s66 = sadd.s32 %s65, 1
    %s67 = scalar_select %p64, %s65, %s66
    %p70 = pneg %p64
    %p71 = scmp.eq.s32.totalorder %s11, 7
    %p72 = por %p70, %p71
    %p73 = scmp.ne.s32.totalorder %s65, %s68
    %p74 = scmp.eq.s32.totalorder %s11, 0
    %p75 = por %p73, %p74
    %p76 = scmp.ne.s32.totalorder %s65, %s68
    %p77 = scmp.eq.s32.totalorder %s16, 7
    %p78 = por %p76, %p77
    %p79 = scmp.ne.s32.totalorder %s68, %s69
    %p80 = scmp.eq.s32.totalorder %s16, 0
    %p81 = por %p79, %p80
    %p82 = scmp.ne.s32.totalorder %s68, %s69
    %p83 = scmp.eq.s32.totalorder %s17, 7
    %p84 = por %p82, %p83
    %p86 = scmp.ne.s32.totalorder %s69, %s85
    %p87 = scmp.eq.s32.totalorder %s17, 0
    %p88 = por %p86, %p87
    %s90 = sadd.s32 %s89, 1
    %p93 = scmp.eq.s32.totalorder %s11, 7
    %p94 = scmp.ne.s32.totalorder %s89, %s91
    %p95 = scmp.eq.s32.totalorder %s11, 0
    %p96 = por %p94, %p95
    %p97 = scmp.ne.s32.totalorder %s89, %s91
    %p98 = scmp.eq.s32.totalorder %s16, 7
    %p99 = por %p97, %p98
    %p100 = scmp.ne.s32.totalorder %s91, %s92
    %p101 = scmp.eq.s32.totalorder %s16, 0
    %p102 = por %p100, %p101
    %p103 = scmp.ne.s32.totalorder %s91, %s92
    %p104 = scmp.eq.s32.totalorder %s17, 7
    %p105 = por %p103, %p104
    %p107 = scmp.ne.s32.totalorder %s92, %s106
    %p108 = scmp.eq.s32.totalorder %s17, 0
    %p109 = por %p107, %p108
    %s110 = ssub.s32 %s18, %s30
    %s111 = ssub.s32 %s19, %s26
    %s112 = sor.u32 %s110, %s111
    %p113 = scmp.eq.s32.totalorder %s112, 0
    %s115 = sadd.s32 %s114, 1
    %s116 = scalar_select %p113, %s114, %s115
    %p119 = pneg %p113
    %p120 = scmp.eq.s32.totalorder %s11, 7
    %p121 = por %p119, %p120
    %p122 = scmp.ne.s32.totalorder %s114, %s117
    %p123 = scmp.eq.s32.totalorder %s11, 0
    %p124 = por %p122, %p123
    %p125 = scmp.ne.s32.totalorder %s114, %s117
    %p126 = scmp.eq.s32.totalorder %s16, 7
    %p127 = por %p125, %p126
    %p128 = scmp.ne.s32.totalorder %s117, %s118
    %p129 = scmp.eq.s32.totalorder %s16, 0
    %p130 = por %p128, %p129
    %p131 = scmp.ne.s32.totalorder %s117, %s118
    %p132 = scmp.eq.s32.totalorder %s17, 7
    %p133 = por %p131, %p132
    %p135 = scmp.ne.s32.totalorder %s118, %s134
    %p136 = scmp.eq.s32.totalorder %s17, 0
    %p137 = por %p135, %p136
    %s138 = ssub.s32 %s18, %s30
    %p139 = scmp.eq.s32.totalorder %s138, 0
    %s141 = sadd.s32 %s140, 1
    %s142 = scalar_select %p139, %s140, %s141
    %p145 = pneg %p139
    %p146 = scmp.eq.s32.totalorder %s11, 7
    %p147 = por %p145, %p146
    %p148 = scmp.ne.s32.totalorder %s140, %s143
    %p149 = scmp.eq.s32.totalorder %s11, 0
    %p150 = por %p148, %p149
    %p151 = scmp.ne.s32.totalorder %s140, %s143
    %p152 = scmp.eq.s32.totalorder %s16, 7
    %p153 = por %p151, %p152
    %p154 = scmp.ne.s32.totalorder %s143, %s144
    %p155 = scmp.eq.s32.totalorder %s16, 0
    %p156 = por %p154, %p155
    %p157 = scmp.ne.s32.totalorder %s143, %s144
    %p158 = scmp.eq.s32.totalorder %s17, 7
    %p159 = por %p157, %p158
    %p161 = scmp.ne.s32.totalorder %s144, %s160
    %p162 = scmp.eq.s32.totalorder %s17, 0
    %p163 = por %p161, %p162
    %p164 = scmp.le.s32.totalorder 1, %s11
    %p165 = scmp.lt.s32.totalorder %s11, 9
    %p166 = pnand %p164, %p165
    %p167 = pneg %p166
    // Predicated region
    $region9: #{_lambda_.6} parent=5 // pred_check
      _
    $region10: #{_lambda_.6} parent=5 // pred_check_branch
      %169 = sbr.rel (%p166) target = $region12
    $region11: #{_lambda_.6} parent=5 // pred_region
      %s170 = ssub.s32 %s11, 1
      // Predicated region
      $region13: #{_lambda_.6} parent=11 // pred_check
        %p171 = pneg %p102
      $region14: #{_lambda_.6} parent=11 // pred_check_branch
        %173 = sbr.rel (%p171) target = $region16
      $region15: #{_lambda_.6} parent=11 // pred_region
        _
      $region16: #{_lambda_.6} parent=11 // pred_fallthru
        _
    $region12: #{_lambda_.6} parent=5 // pred_fallthru
      _
    %p174 = scmp.lt.s32.totalorder %s11, 8
    // Predicated region
    $region17: #{_lambda_.6} parent=5 // pred_check
      %p175 = pneg %p174
    $region18: #{_lambda_.6} parent=5 // pred_check_branch
      %177 = sbr.rel (%p175) target = $region20
    $region19: #{_lambda_.6} parent=5 // pred_region
      // Predicated region
      $region21: #{_lambda_.6} parent=19 // pred_check
        %p178 = pneg %p45
      $region22: #{_lambda_.6} parent=19 // pred_check_branch
        %180 = sbr.rel (%p178) target = $region24
      $region23: #{_lambda_.6} parent=19 // pred_region
        %p181 = scmp.lt.s32.totalorder %s18, 1
        %s182 = scalar_select %p181, %s18, 1
        %p183 = scmp.lt.s32.totalorder %s19, 4
        %s184 = scalar_select %p183, %s19, 4
        %s185 = smul.addr %s182, 5
        %s186 = sadd.s32 %s184, %s185
        %s187 = smul.addr %s186, 4
        %s188 = scalar_lea.vmem %s0, %s187
      $region24: #{_lambda_.6} parent=19 // pred_fallthru
        _
      // Predicated region
      $region25: #{_lambda_.6} parent=19 // pred_check
        %p189 = pneg %p75
      $region26: #{_lambda_.6} parent=19 // pred_check_branch
        %191 = sbr.rel (%p189) target = $region28
      $region27: #{_lambda_.6} parent=19 // pred_region
        %s192 = sadd.s32 %s19, 1
        %p193 = scmp.lt.s32.totalorder %s18, 1
        %s194 = scalar_select %p193, %s18, 1
        %p195 = scmp.lt.s32.totalorder %s192, 4
        %s196 = scalar_select %p195, %s192, 4
        %s197 = smul.addr %s194, 5
        %s198 = sadd.s32 %s196, %s197
        %s199 = smul.addr %s198, 4
        %s200 = scalar_lea.vmem %s1, %s199
        %s201 = sadd.s32 %s19, 1
      $region28: #{_lambda_.6} parent=19 // pred_fallthru
        _
    $region20: #{_lambda_.6} parent=5 // pred_fallthru
      _
    %p202 = scmp.le.s32.totalorder 1, %s11
    %p203 = scmp.lt.s32.totalorder %s11, 9
    %p204 = pnand %p202, %p203
    %p205 = pneg %p204
    // Predicated region
    $region29: #{_lambda_.6} parent=5 // pred_check
      _
    $region30: #{_lambda_.6} parent=5 // pred_check_branch
      %207 = sbr.rel (%p204) target = $region32
    $region31: #{_lambda_.6} parent=5 // pred_region
      %s208 = ssub.s32 %s11, 1
      %p209 = scmp.lt.s32.totalorder %s20, 1
      %s210 = scalar_select %p209, %s20, 1
      %p211 = scmp.lt.s32.totalorder %s21, 4
      %s212 = scalar_select %p211, %s21, 4
      %s213 = smul.addr %s210, 5
      %s214 = sadd.s32 %s212, %s213
      %s215 = smul.addr %s214, 4
      %s216 = scalar_lea.vmem %s0, %s215
      %p217 = pneg %p51
      %p218 = pneg %p48
      %s219 = sadd.s32 %s21, 1
      %p220 = scmp.lt.s32.totalorder %s20, 1
      %s221 = scalar_select %p220, %s20, 1
      %p222 = scmp.lt.s32.totalorder %s219, 4
      %s223 = scalar_select %p222, %s219, 4
      %s224 = smul.addr %s221, 5
      %s225 = sadd.s32 %s223, %s224
      %s226 = smul.addr %s225, 4
      %s227 = scalar_lea.vmem %s1, %s226
      %p228 = pneg %p81
      %p229 = pneg %p78
      %p230 = pneg %p102
      %p231 = pneg %p99
      %p232 = pneg %p130
      %p233 = pneg %p127
      %p234 = scmp.lt.s32.totalorder %s20, 1
      %s235 = scalar_select %p234, %s20, 1
      %p236 = scmp.lt.s32.totalorder %s21, 3
      %s237 = scalar_select %p236, %s21, 3
      %s238 = smul.addr %s235, 4
      %s239 = sadd.s32 %s237, %s238
      %s240 = smul.addr %s239, 2
      %s241 = scalar_lea.vmem %s3, %s240
      %p242 = pneg %p156
      %p243 = pneg %p153
      %p244 = scmp.lt.s32.totalorder %s20, 1
      %s245 = scalar_select %p244, %s20, 1
      %s246 = smul.addr %s245, 2
      %s247 = scalar_lea.vmem %s4, %s246
      %p248 = scmp.lt.s32.totalorder %s20, 1
      %s249 = scalar_select %p248, %s20, 1
      %p250 = scmp.lt.s32.totalorder %s21, 4
      %s251 = scalar_select %p250, %s21, 4
      %s252 = smul.addr %s249, 5
      %s253 = sadd.s32 %s251, %s252
      %s254 = smul.addr %s253, 4
      %s255 = scalar_lea.vmem %s0, %s254
      %s256 = sadd.s32 %s21, 1
      %p257 = scmp.lt.s32.totalorder %s20, 1
      %s258 = scalar_select %p257, %s20, 1
      %p259 = scmp.lt.s32.totalorder %s256, 4
      %s260 = scalar_select %p259, %s256, 4
      %s261 = smul.addr %s258, 5
      %s262 = sadd.s32 %s260, %s261
      %s263 = smul.addr %s262, 4
      %s264 = scalar_lea.vmem %s1, %s263
      %s265 = sadd.s32 %s21, 1
      %p266 = scmp.lt.s32.totalorder %s20, 1
      %s267 = scalar_select %p266, %s20, 1
      %p268 = scmp.lt.s32.totalorder %s21, 3
      %s269 = scalar_select %p268, %s21, 3
      %s270 = smul.addr %s267, 4
      %s271 = sadd.s32 %s269, %s270
      %s272 = smul.addr %s271, 2
      %s273 = scalar_lea.vmem %s3, %s272
      %p274 = scmp.lt.s32.totalorder %s20, 1
      %s275 = scalar_select %p274, %s20, 1
      %s276 = smul.addr %s275, 2
      %s277 = scalar_lea.vmem %s4, %s276
      %v279 = vld [vmem:[%s255] sm:$0x7]
      %v280 = vld [vmem:[%s264] sm:$0x7]
      %v281 = vld [vmem:[%s2] sm:$0xf]
      %s282 = scalar_lea.vmem %s2, 4
      %v283 = vld [vmem:[%s282] sm:$0xf]
      %v285 = vunpack.c.l.b16 %v279
      %v286 = vpack.c.b16 %v285, %v285
      %v288 = vshrl.u32 %v286, 16
      %v290 = vshll.u32 %v286, 16
      %v292 = vrot.slane %v290, 1
      %v293 = vor.u32 %v288, %v292
      %vm294 = vcmask 64512
      %v296 = vsel %vm294, %v293, 0
      %vm298 = vcmask 1043456
      %v300 = vsel %vm298, %v283, 0
      %302 = vmatprep.subr.bf16.mxu0 0
      %303 = vmatpush1.bf16.msra.mxu0 %v300
      %304 = vmatprep.subr.bf16.mxu0 0
      %305 = vmatpush1.bf16.msra.mxu0 0
      %306 = vmatprep.subr.bf16.mxu0 0
      %307 = vmatpush1.bf16.msra.mxu0 0
      %308 = vmatprep.subr.bf16.mxu0 0
      %309 = vmatpush1.bf16.msra.mxu0 0
      %310 = vmatprep.subr.bf16.mxu0 0
      %311 = vmatpush1.bf16.msra.mxu0 0
      %312 = vmatprep.subr.bf16.mxu0 0
      %313 = vmatpush1.bf16.msra.mxu0 0
      %314 = vmatprep.subr.bf16.mxu0 0
      %315 = vmatpush1.bf16.msra.mxu0 0
      %316 = vmatprep.subr.bf16.mxu0 0
      %317 = vmatpush1.bf16.msra.mxu0 0
      %318 = vmatprep.subr.bf16.mxu0 0
      %319 = vmatpush1.bf16.msra.mxu0 0
      %320 = vmatprep.subr.bf16.mxu0 0
      %321 = vmatpush1.bf16.msra.mxu0 0
      %322 = vmatprep.subr.bf16.mxu0 0
      %323 = vmatpush1.bf16.msra.mxu0 0
      %324 = vmatprep.subr.bf16.mxu0 0
      %325 = vmatpush1.bf16.msra.mxu0 0
      %326 = vmatprep.subr.bf16.mxu0 0
      %327 = vmatpush1.bf16.msra.mxu0 0
      %328 = vmatprep.subr.bf16.mxu0 0
      %329 = vmatpush1.bf16.msra.mxu0 0
      %330 = vmatprep.subr.bf16.mxu0 0
      %331 = vmatpush1.bf16.msra.mxu0 0
      %332 = vmatprep.subr.bf16.mxu0 0
      %333 = vmatpush1.bf16.msra.mxu0 0
      %334 = vmatprep.mubr.bf16.mxu0 0
      %335 = vmatmul.mubr.bf16.gmra.mrb[0].mxu0 %v296
      %v336 = vpop.f32.mrb[0].mxu0
      %v337 = vadd.f32 0.0, %v336
      %v338 = vpop.f32.mrb[0].mxu0
      %v339 = vpop.f32.mrb[0].mxu0
      %v340 = vpop.f32.mrb[0].mxu0
      %341 = vdwg.mxu0
      %v343 = vsel %vm294, %v279, 0
      %v346 = vsel %vm298, %v281, 0
      %348 = vmatprep.subr.bf16.mxu0 0
      %349 = vmatpush1.bf16.msra.mxu0 %v346
      %350 = vmatprep.subr.bf16.mxu0 0
      %351 = vmatpush1.bf16.msra.mxu0 0
      %352 = vmatprep.subr.bf16.mxu0 0
      %353 = vmatpush1.bf16.msra.mxu0 0
      %354 = vmatprep.subr.bf16.mxu0 0
      %355 = vmatpush1.bf16.msra.mxu0 0
      %356 = vmatprep.subr.bf16.mxu0 0
      %357 = vmatpush1.bf16.msra.mxu0 0
      %358 = vmatprep.subr.bf16.mxu0 0
      %359 = vmatpush1.bf16.msra.mxu0 0
      %360 = vmatprep.subr.bf16.mxu0 0
      %361 = vmatpush1.bf16.msra.mxu0 0
      %362 = vmatprep.subr.bf16.mxu0 0
      %363 = vmatpush1.bf16.msra.mxu0 0
      %364 = vmatprep.subr.bf16.mxu0 0
      %365 = vmatpush1.bf16.msra.mxu0 0
      %366 = vmatprep.subr.bf16.mxu0 0
      %367 = vmatpush1.bf16.msra.mxu0 0
      %368 = vmatprep.subr.bf16.mxu0 0
      %369 = vmatpush1.bf16.msra.mxu0 0
      %370 = vmatprep.subr.bf16.mxu0 0
      %371 = vmatpush1.bf16.msra.mxu0 0
      %372 = vmatprep.subr.bf16.mxu0 0
      %373 = vmatpush1.bf16.msra.mxu0 0
      %374 = vmatprep.subr.bf16.mxu0 0
      %375 = vmatpush1.bf16.msra.mxu0 0
      %376 = vmatprep.subr.bf16.mxu0 0
      %377 = vmatpush1.bf16.msra.mxu0 0
      %378 = vmatprep.subr.bf16.mxu0 0
      %379 = vmatpush1.bf16.msra.mxu0 0
      %380 = vmatprep.mubr.bf16.mxu0 0
      %381 = vmatmul.mubr.bf16.gmra.mrb[0].mxu0 %v343
      %v382 = vpop.f32.mrb[0].mxu0
      %v383 = vadd.f32 %v337, %v382
      %v384 = vpop.f32.mrb[0].mxu0
      %v385 = vpop.f32.mrb[0].mxu0
      %v386 = vpop.f32.mrb[0].mxu0
      %387 = vdwg.mxu0
      %s388 = scalar_lea.vmem %s2, 8
      %v389 = vld [vmem:[%s388] sm:$0xf]
      %v391 = vsel %vm294, %v280, 0
      %v394 = vsel %vm298, %v389, 0
      %396 = vmatprep.subr.bf16.mxu0 0
      %397 = vmatpush1.bf16.msra.mxu0 %v394
      %398 = vmatprep.subr.bf16.mxu0 0
      %399 = vmatpush1.bf16.msra.mxu0 0
      %400 = vmatprep.subr.bf16.mxu0 0
      %401 = vmatpush1.bf16.msra.mxu0 0
      %402 = vmatprep.subr.bf16.mxu0 0
      %403 = vmatpush1.bf16.msra.mxu0 0
      %404 = vmatprep.subr.bf16.mxu0 0
      %405 = vmatpush1.bf16.msra.mxu0 0
      %406 = vmatprep.subr.bf16.mxu0 0
      %407 = vmatpush1.bf16.msra.mxu0 0
      %408 = vmatprep.subr.bf16.mxu0 0
      %409 = vmatpush1.bf16.msra.mxu0 0
      %410 = vmatprep.subr.bf16.mxu0 0
      %411 = vmatpush1.bf16.msra.mxu0 0
      %412 = vmatprep.subr.bf16.mxu0 0
      %413 = vmatpush1.bf16.msra.mxu0 0
      %414 = vmatprep.subr.bf16.mxu0 0
      %415 = vmatpush1.bf16.msra.mxu0 0
      %416 = vmatprep.subr.bf16.mxu0 0
      %417 = vmatpush1.bf16.msra.mxu0 0
      %418 = vmatprep.subr.bf16.mxu0 0
      %419 = vmatpush1.bf16.msra.mxu0 0
      %420 = vmatprep.subr.bf16.mxu0 0
      %421 = vmatpush1.bf16.msra.mxu0 0
      %422 = vmatprep.subr.bf16.mxu0 0
      %423 = vmatpush1.bf16.msra.mxu0 0
      %424 = vmatprep.subr.bf16.mxu0 0
      %425 = vmatpush1.bf16.msra.mxu0 0
      %426 = vmatprep.subr.bf16.mxu0 0
      %427 = vmatpush1.bf16.msra.mxu0 0
      %428 = vmatprep.mubr.bf16.mxu0 0
      %429 = vmatmul.mubr.bf16.gmra.mrb[0].mxu0 %v391
      %v430 = vpop.f32.mrb[0].mxu0
      %v431 = vadd.f32 0.0, %v430
      %v432 = vpop.f32.mrb[0].mxu0
      %v433 = vpop.f32.mrb[0].mxu0
      %v434 = vpop.f32.mrb[0].mxu0
      %435 = vdwg.mxu0
      %v436 = vadd.f32 %v383, %v431
      %s437 = scalar_lea.vmem %s2, 12
      %v438 = vld [vmem:[%s437] sm:$0xf]
      %v440 = vunpack.c.l.b16 %v280
      %v441 = vpack.c.b16 %v440, %v440
      %v443 = vshrl.u32 %v441, 16
      %v445 = vshll.u32 %v441, 16
      %v447 = vrot.slane %v445, 1
      %v448 = vor.u32 %v443, %v447
      %v450 = vsel %vm294, %v448, 0
      %v453 = vsel %vm298, %v438, 0
      %455 = vmatprep.subr.bf16.mxu0 0
      %456 = vmatpush1.bf16.msra.mxu0 %v453
      %457 = vmatprep.subr.bf16.mxu0 0
      %458 = vmatpush1.bf16.msra.mxu0 0
      %459 = vmatprep.subr.bf16.mxu0 0
      %460 = vmatpush1.bf16.msra.mxu0 0
      %461 = vmatprep.subr.bf16.mxu0 0
      %462 = vmatpush1.bf16.msra.mxu0 0
      %463 = vmatprep.subr.bf16.mxu0 0
      %464 = vmatpush1.bf16.msra.mxu0 0
      %465 = vmatprep.subr.bf16.mxu0 0
      %466 = vmatpush1.bf16.msra.mxu0 0
      %467 = vmatprep.subr.bf16.mxu0 0
      %468 = vmatpush1.bf16.msra.mxu0 0
      %469 = vmatprep.subr.bf16.mxu0 0
      %470 = vmatpush1.bf16.msra.mxu0 0
      %471 = vmatprep.subr.bf16.mxu0 0
      %472 = vmatpush1.bf16.msra.mxu0 0
      %473 = vmatprep.subr.bf16.mxu0 0
      %474 = vmatpush1.bf16.msra.mxu0 0
      %475 = vmatprep.subr.bf16.mxu0 0
      %476 = vmatpush1.bf16.msra.mxu0 0
      %477 = vmatprep.subr.bf16.mxu0 0
      %478 = vmatpush1.bf16.msra.mxu0 0
      %479 = vmatprep.subr.bf16.mxu0 0
      %480 = vmatpush1.bf16.msra.mxu0 0
      %481 = vmatprep.subr.bf16.mxu0 0
      %482 = vmatpush1.bf16.msra.mxu0 0
      %483 = vmatprep.subr.bf16.mxu0 0
      %484 = vmatpush1.bf16.msra.mxu0 0
      %485 = vmatprep.subr.bf16.mxu0 0
      %486 = vmatpush1.bf16.msra.mxu0 0
      %487 = vmatprep.mubr.bf16.mxu0 0
      %488 = vmatmul.mubr.bf16.gmra.mrb[0].mxu0 %v450
      %v489 = vpop.f32.mrb[0].mxu0
      %v490 = vadd.f32 0.0, %v489
      %v491 = vpop.f32.mrb[0].mxu0
      %v492 = vpop.f32.mrb[0].mxu0
      %v493 = vpop.f32.mrb[0].mxu0
      %494 = vdwg.mxu0
      %v495 = vadd.f32 %v436, %v490
      %v496 = vpack.c.bf16 %v495, %v495
      %497 = vst [vmem:[%s273] sm:$0x3] %v496
      %p498 = scmp.eq.s32.totalorder %s21, 0
      // Predicated region
      $region33: #{_lambda_.6} parent=31 // pred_check
        %p499 = pneg %p498
      $region34: #{_lambda_.6} parent=31 // pred_check_branch
        %501 = sbr.rel (%p499) target = $region36
      $region35: #{_lambda_.6} parent=31 // pred_region
        %502 = vst [vmem:[%s277] sm:$0x3] 0.0
      $region36: #{_lambda_.6} parent=31 // pred_fallthru
        _
      %v503 = vld [vmem:[%s277] sm:$0x1]
      %v504 = vsel %vm298, %v495, 0.0
      %v505 = vrot.slane %v504, 4
      %v506 = vadd.f32 %v504, %v505
      %v507 = vrot.slane %v506, 2
      %v508 = vadd.f32 %v506, %v507
      %v509 = vrot.slane %v508, 1
      %v510 = vadd.f32 %v508, %v509
      %v511 = vadd.f32 %v503, %v510
      %512 = vst [vmem:[%s277] sm:$0x1] %v511
      %v513 = vld [vmem:[%s277 + $0x1] sm:$0x1]
      %v514 = vmul.f32 %v495, %v495
      %v515 = vsel %vm298, %v514, 0.0
      %v516 = vrot.slane %v515, 4
      %v517 = vadd.f32 %v515, %v516
      %v518 = vrot.slane %v517, 2
      %v519 = vadd.f32 %v517, %v518
      %v520 = vrot.slane %v519, 1
      %v521 = vadd.f32 %v519, %v520
      %v522 = vadd.f32 %v513, %v521
      %523 = vst [vmem:[%s277 + $0x1] sm:$0x1] %v522
      %p524 = scmp.lt.s32.totalorder %s20, 1
      %s525 = scalar_select %p524, %s20, 1
      %p526 = scmp.lt.s32.totalorder %s21, 3
      %s527 = scalar_select %p526, %s21, 3
      %s528 = smul.addr %s525, 4
      %s529 = sadd.s32 %s527, %s528
      %s530 = smul.addr %s529, 2
      %s531 = scalar_lea.vmem %s3, %s530
      %p532 = scmp.lt.s32.totalorder %s20, 1
      %s533 = scalar_select %p532, %s20, 1
      %s534 = smul.addr %s533, 2
      %s535 = scalar_lea.vmem %s4, %s534
      // Predicated region
      $region37: #{_lambda_.6} parent=31 // pred_check
        %p536 = pneg %p127
      $region38: #{_lambda_.6} parent=31 // pred_check_branch
        %538 = sbr.rel (%p536) target = $region40
      $region39: #{_lambda_.6} parent=31 // pred_region
        _
      $region40: #{_lambda_.6} parent=31 // pred_fallthru
        _
      // Predicated region
      $region41: #{_lambda_.6} parent=31 // pred_check
        %p539 = pneg %p153
      $region42: #{_lambda_.6} parent=31 // pred_check_branch
        %541 = sbr.rel (%p539) target = $region44
      $region43: #{_lambda_.6} parent=31 // pred_region
        _
      $region44: #{_lambda_.6} parent=31 // pred_fallthru
        _
    $region32: #{_lambda_.6} parent=5 // pred_fallthru
      _
    %p542 = scmp.le.s32.totalorder 2, %s11
    // Predicated region
    $region45: #{_lambda_.6} parent=5 // pred_check
      %p543 = pneg %p542
    $region46: #{_lambda_.6} parent=5 // pred_check_branch
      %545 = sbr.rel (%p543) target = $region48
    $region47: #{_lambda_.6} parent=5 // pred_region
      %s546 = ssub.s32 %s11, 2
      // Predicated region
      $region49: #{_lambda_.6} parent=47 // pred_check
        %p547 = pneg %p133
      $region50: #{_lambda_.6} parent=47 // pred_check_branch
        %549 = sbr.rel (%p547) target = $region52
      $region51: #{_lambda_.6} parent=47 // pred_region
        %p550 = scmp.lt.s32.totalorder %s22, 1
        %s551 = scalar_select %p550, %s22, 1
        %p552 = scmp.lt.s32.totalorder %s23, 3
        %s553 = scalar_select %p552, %s23, 3
        %s554 = smul.addr %s551, 4
        %s555 = sadd.s32 %s553, %s554
        %s556 = smul.addr %s555, 2
        %s557 = scalar_lea.vmem %s3, %s556
      $region52: #{_lambda_.6} parent=47 // pred_fallthru
        _
      // Predicated region
      $region53: #{_lambda_.6} parent=47 // pred_check
        %p558 = pneg %p159
      $region54: #{_lambda_.6} parent=47 // pred_check_branch
        %560 = sbr.rel (%p558) target = $region56
      $region55: #{_lambda_.6} parent=47 // pred_region
        %p561 = scmp.lt.s32.totalorder %s22, 1
        %s562 = scalar_select %p561, %s22, 1
        %s563 = smul.addr %s562, 2
        %s564 = scalar_lea.vmem %s4, %s563
      $region56: #{_lambda_.6} parent=47 // pred_fallthru
        _
    $region48: #{_lambda_.6} parent=5 // pred_fallthru
      _
  $region6: #{_lambda_.6} parent=0 // loop_footer
    %s15 = sadd.s32 1, %s11
  $region7: #{_lambda_.6} parent=0 // loop_footer_branch
    %10 = sbr.rel target = $region3
  $region8: #{_lambda_.6} parent=0 // loop_exit
    _

// kernel: _lambda_.7
$region0: #{_lambda_.7}
  #allocation0 [shape = 'u32[]', space=smem, size = 0x4, offset = 0x4, fixed_abs, tag = 'smem constant byte address 0x4 - core index']
  #allocation1 [shape = 'u32[144,128]{1,0:T(1,128)}', space=vmem, size = 0x12000, scoped, tag = 'internal scratch']
  #allocation2 [shape = 'f32[1,1]{1,0:T(1,128)S(1)}', space=vmem, size = 0x200, scoped, tag = 'scoped memory for _lambda_.7']
  %s0 = inlined_call_operand.vmem [shape: bf16[2,10,8,10], index: 0, kind: input, shape index: {}, may-alias: {0,1,2}]
  %s1 = inlined_call_operand.vmem [shape: bf16[2,10,8,10], index: 1, kind: input, shape index: {}, may-alias: {0,1,2}]
  %s2 = inlined_call_operand.vmem [shape: bf16[2,10,8,10], index: 2, kind: input, shape index: {}, may-alias: {0,1,2}]
  %s3 = inlined_call_operand.vmem [shape: f32[3,3,8,1], index: 3, kind: input, shape index: {}]
  %s4 = inlined_call_operand.<no memory space> [shape: f32[1,1], index: 4, kind: input, shape index: {}]
  %s5 = inlined_call_operand.hbm [shape: f32[2,8,1,8], index: 5, kind: output, shape index: {}]
  %s6 = sld [smem:[#allocation0]]
  $region53: #{_lambda_.7} parent=0
    _
  %s8 = ssub.s32 1, %s6
  %s9 = scalar_select 0, %s8, %s6
  %v10 = vstv %s4
  %11 = vst [vmem:[#allocation2] sm:$0x1] %v10
  $region1: #{_lambda_.7} parent=0
    #allocation3 [shape = 'u8[1024]{0}', space=vmem, size = 0x400, scoped, tag = 'output window, operand 0']
    #allocation4 [shape = 's32[2]{0}', space=sflag, size = 0x8, scoped, tag = 'scoped memory for _lambda_.7']
    %12 = vsyncpa [#allocation4], 0
    %s13 = scalar_lea.sflag [#allocation4], 1
    %14 = vsyncpa %s13, 0
    loop: start=0, step=1, limit=18
    $region2: #{_lambda_.7} parent=1 // loop_pre_header
      _
    $region3: #{_lambda_.7} parent=1 // loop_header
      %s16 = sphi 0, %s20
      %p17 = scmp.ge.s32.totalorder %s16, 18
      %s23 = sphi 0, %s35
      %s24 = sphi 0, %s31
      %s25 = sphi 0, %s23
      %s26 = sphi 0, %s24
      %s27 = sphi 0, %s25
      %s28 = sphi 0, %s26
      %s40 = sphi 0, %s42
      %s43 = sphi 0, %s40
      %s44 = sphi 0, %s43
      %s60 = sphi 0, %s44
      %s70 = sphi 0, %s72
      %s73 = sphi 0, %s70
      %s74 = sphi 0, %s73
      %s90 = sphi 0, %s74
      %s100 = sphi 0, %s102
      %s103 = sphi 0, %s100
      %s104 = sphi 0, %s103
      %s120 = sphi 0, %s104
      %s124 = sphi 0, %s124
      %s126 = sphi 0, %s124
      %s127 = sphi 0, %s126
      %s141 = sphi 0, %s127
      %s145 = sphi 0, %s145
      %s147 = sphi 0, %s145
      %s148 = sphi 0, %s147
      %s162 = sphi 0, %s148
      %s170 = sphi 0, %s172
      %s173 = sphi 0, %s170
      %s174 = sphi 0, %s173
      %s190 = sphi 0, %s174
    $region4: #{_lambda_.7} parent=1 // loop_header_branch
      %19 = sbr.rel (%p17) target = $region8
    $region5: #{_lambda_.7} parent=1 // loop_body
      %s21 = ssub.s32 %s16, 1
      %s22 = ssub.s32 %s16, 2
      %s29 = sadd.s32 1, %s24
      %p30 = scmp.ge.s32.totalorder %s29, 8
      %s31 = scalar_select %p30, 0, %s29
      %s32 = sadd.s32 1, %s23
      %s33 = scalar_select %p30, %s32, %s23
      %p34 = scmp.ge.s32.totalorder %s33, 2
      %s35 = scalar_select %p34, 0, %s33
      %s36 = ssub.s32 %s23, %s35
      %s37 = ssub.s32 %s24, %s31
      %s38 = sor.u32 %s36, %s37
      %p39 = scmp.eq.s32.totalorder %s38, 0
      %s41 = sadd.s32 %s40, 1
      %s42 = scalar_select %p39, %s40, %s41
      %p45 = pneg %p39
      %p46 = scmp.eq.s32.totalorder %s16, 15
      %p47 = por %p45, %p46
      %p48 = scmp.ne.s32.totalorder %s40, %s43
      %p49 = scmp.eq.s32.totalorder %s16, 0
      %p50 = por %p48, %p49
      %p51 = scmp.ne.s32.totalorder %s40, %s43
      %p52 = scmp.eq.s32.totalorder %s21, 15
      %p53 = por %p51, %p52
      %p54 = scmp.ne.s32.totalorder %s43, %s44
      %p55 = scmp.eq.s32.totalorder %s21, 0
      %p56 = por %p54, %p55
      %p57 = scmp.ne.s32.totalorder %s43, %s44
      %p58 = scmp.eq.s32.totalorder %s22, 15
      %p59 = por %p57, %p58
      %p61 = scmp.ne.s32.totalorder %s44, %s60
      %p62 = scmp.eq.s32.totalorder %s22, 0
      %p63 = por %p61, %p62
      %s64 = sadd.s32 %s24, 1
      %s65 = sadd.s32 %s31, 1
      %s66 = ssub.s32 %s23, %s35
      %s67 = ssub.s32 %s64, %s65
      %s68 = sor.u32 %s66, %s67
      %p69 = scmp.eq.s32.totalorder %s68, 0
      %s71 = sadd.s32 %s70, 1
      %s72 = scalar_select %p69, %s70, %s71
      %p75 = pneg %p69
      %p76 = scmp.eq.s32.totalorder %s16, 15
      %p77 = por %p75, %p76
      %p78 = scmp.ne.s32.totalorder %s70, %s73
      %p79 = scmp.eq.s32.totalorder %s16, 0
      %p80 = por %p78, %p79
      %p81 = scmp.ne.s32.totalorder %s70, %s73
      %p82 = scmp.eq.s32.totalorder %s21, 15
      %p83 = por %p81, %p82
      %p84 = scmp.ne.s32.totalorder %s73, %s74
      %p85 = scmp.eq.s32.totalorder %s21, 0
      %p86 = por %p84, %p85
      %p87 = scmp.ne.s32.totalorder %s73, %s74
      %p88 = scmp.eq.s32.totalorder %s22, 15
      %p89 = por %p87, %p88
      %p91 = scmp.ne.s32.totalorder %s74, %s90
      %p92 = scmp.eq.s32.totalorder %s22, 0
      %p93 = por %p91, %p92
      %s94 = sadd.s32 %s24, 2
      %s95 = sadd.s32 %s31, 2
      %s96 = ssub.s32 %s23, %s35
      %s97 = ssub.s32 %s94, %s95
      %s98 = sor.u32 %s96, %s97
      %p99 = scmp.eq.s32.totalorder %s98, 0
      %s101 = sadd.s32 %s100, 1
      %s102 = scalar_select %p99, %s100, %s101
      %p105 = pneg %p99
      %p106 = scmp.eq.s32.totalorder %s16, 15
      %p107 = por %p105, %p106
      %p108 = scmp.ne.s32.totalorder %s100, %s103
      %p109 = scmp.eq.s32.totalorder %s16, 0
      %p110 = por %p108, %p109
      %p111 = scmp.ne.s32.totalorder %s100, %s103
      %p112 = scmp.eq.s32.totalorder %s21, 15
      %p113 = por %p111, %p112
      %p114 = scmp.ne.s32.totalorder %s103, %s104
      %p115 = scmp.eq.s32.totalorder %s21, 0
      %p116 = por %p114, %p115
      %p117 = scmp.ne.s32.totalorder %s103, %s104
      %p118 = scmp.eq.s32.totalorder %s22, 15
      %p119 = por %p117, %p118
      %p121 = scmp.ne.s32.totalorder %s104, %s120
      %p122 = scmp.eq.s32.totalorder %s22, 0
      %p123 = por %p121, %p122
      %s125 = sadd.s32 %s124, 1
      %p128 = scmp.eq.s32.totalorder %s16, 15
      %p129 = scmp.ne.s32.totalorder %s124, %s126
      %p130 = scmp.eq.s32.totalorder %s16, 0
      %p131 = por %p129, %p130
      %p132 = scmp.ne.s32.totalorder %s124, %s126
      %p133 = scmp.eq.s32.totalorder %s21, 15
      %p134 = por %p132, %p133
      %p135 = scmp.ne.s32.totalorder %s126, %s127
      %p136 = scmp.eq.s32.totalorder %s21, 0
      %p137 = por %p135, %p136
      %p138 = scmp.ne.s32.totalorder %s126, %s127
      %p139 = scmp.eq.s32.totalorder %s22, 15
      %p140 = por %p138, %p139
      %p142 = scmp.ne.s32.totalorder %s127, %s141
      %p143 = scmp.eq.s32.totalorder %s22, 0
      %p144 = por %p142, %p143
      %s146 = sadd.s32 %s145, 1
      %p149 = scmp.eq.s32.totalorder %s16, 15
      %p150 = scmp.ne.s32.totalorder %s145, %s147
      %p151 = scmp.eq.s32.totalorder %s16, 0
      %p152 = por %p150, %p151
      %p153 = scmp.ne.s32.totalorder %s145, %s147
      %p154 = scmp.eq.s32.totalorder %s21, 15
      %p155 = por %p153, %p154
      %p156 = scmp.ne.s32.totalorder %s147, %s148
      %p157 = scmp.eq.s32.totalorder %s21, 0
      %p158 = por %p156, %p157
      %p159 = scmp.ne.s32.totalorder %s147, %s148
      %p160 = scmp.eq.s32.totalorder %s22, 15
      %p161 = por %p159, %p160
      %p163 = scmp.ne.s32.totalorder %s148, %s162
      %p164 = scmp.eq.s32.totalorder %s22, 0
      %p165 = por %p163, %p164
      %s166 = ssub.s32 %s23, %s35
      %s167 = ssub.s32 %s24, %s31
      %s168 = sor.u32 %s166, %s167
      %p169 = scmp.eq.s32.totalorder %s168, 0
      %s171 = sadd.s32 %s170, 1
      %s172 = scalar_select %p169, %s170, %s171
      %p175 = pneg %p169
      %p176 = scmp.eq.s32.totalorder %s16, 15
      %p177 = por %p175, %p176
      %p178 = scmp.ne.s32.totalorder %s170, %s173
      %p179 = scmp.eq.s32.totalorder %s16, 0
      %p180 = por %p178, %p179
      %p181 = scmp.ne.s32.totalorder %s170, %s173
      %p182 = scmp.eq.s32.totalorder %s21, 15
      %p183 = por %p181, %p182
      %p184 = scmp.ne.s32.totalorder %s173, %s174
      %p185 = scmp.eq.s32.totalorder %s21, 0
      %p186 = por %p184, %p185
      %p187 = scmp.ne.s32.totalorder %s173, %s174
      %p188 = scmp.eq.s32.totalorder %s22, 15
      %p189 = por %p187, %p188
      %p191 = scmp.ne.s32.totalorder %s174, %s190
      %p192 = scmp.eq.s32.totalorder %s22, 0
      %p193 = por %p191, %p192
      %p194 = scmp.le.s32.totalorder 1, %s16
      %p195 = scmp.lt.s32.totalorder %s16, 17
      %p196 = pnand %p194, %p195
      %p197 = pneg %p196
      // Predicated region
      $region9: #{_lambda_.7} parent=5 // pred_check
        _
      $region10: #{_lambda_.7} parent=5 // pred_check_branch
        %199 = sbr.rel (%p196) target = $region12
      $region11: #{_lambda_.7} parent=5 // pred_region
        %s200 = ssub.s32 %s16, 1
        // Predicated region
        $region13: #{_lambda_.7} parent=11 // pred_check
          %p201 = pneg %p137
        $region14: #{_lambda_.7} parent=11 // pred_check_branch
          %203 = sbr.rel (%p201) target = $region16
        $region15: #{_lambda_.7} parent=11 // pred_region
          _
        $region16: #{_lambda_.7} parent=11 // pred_fallthru
          _
        // Predicated region
        $region17: #{_lambda_.7} parent=11 // pred_check
          %p204 = pneg %p158
        $region18: #{_lambda_.7} parent=11 // pred_check_branch
          %206 = sbr.rel (%p204) target = $region20
        $region19: #{_lambda_.7} parent=11 // pred_region
          _
        $region20: #{_lambda_.7} parent=11 // pred_fallthru
          _
      $region12: #{_lambda_.7} parent=5 // pred_fallthru
        _
      %p207 = scmp.lt.s32.totalorder %s16, 16
      // Predicated region
      $region21: #{_lambda_.7} parent=5 // pred_check
        %p208 = pneg %p207
      $region22: #{_lambda_.7} parent=5 // pred_check_branch
        %210 = sbr.rel (%p208) target = $region24
      $region23: #{_lambda_.7} parent=5 // pred_region
        // Predicated region
        $region25: #{_lambda_.7} parent=23 // pred_check
          %p211 = pneg %p50
        $region26: #{_lambda_.7} parent=23 // pred_check_branch
          %213 = sbr.rel (%p211) target = $region28
        $region27: #{_lambda_.7} parent=23 // pred_region
          %p214 = scmp.lt.s32.totalorder %s23, 1
          %s215 = scalar_select %p214, %s23, 1
          %p216 = scmp.lt.s32.totalorder %s24, 9
          %s217 = scalar_select %p216, %s24, 9
          %s218 = smul.addr %s215, 10
          %s219 = sadd.s32 %s217, %s218
          %s220 = smul.addr %s219, 4
          %s221 = scalar_lea.vmem %s0, %s220
        $region28: #{_lambda_.7} parent=23 // pred_fallthru
          _
        // Predicated region
        $region29: #{_lambda_.7} parent=23 // pred_check
          %p222 = pneg %p80
        $region30: #{_lambda_.7} parent=23 // pred_check_branch
          %224 = sbr.rel (%p222) target = $region32
        $region31: #{_lambda_.7} parent=23 // pred_region
          %s225 = sadd.s32 %s24, 1
          %p226 = scmp.lt.s32.totalorder %s23, 1
          %s227 = scalar_select %p226, %s23, 1
          %p228 = scmp.lt.s32.totalorder %s225, 9
          %s229 = scalar_select %p228, %s225, 9
          %s230 = smul.addr %s227, 10
          %s231 = sadd.s32 %s229, %s230
          %s232 = smul.addr %s231, 4
          %s233 = scalar_lea.vmem %s1, %s232
          %s234 = sadd.s32 %s24, 1
        $region32: #{_lambda_.7} parent=23 // pred_fallthru
          _
        // Predicated region
        $region33: #{_lambda_.7} parent=23 // pred_check
          %p235 = pneg %p110
        $region34: #{_lambda_.7} parent=23 // pred_check_branch
          %237 = sbr.rel (%p235) target = $region36
        $region35: #{_lambda_.7} parent=23 // pred_region
          %s238 = sadd.s32 %s24, 2
          %p239 = scmp.lt.s32.totalorder %s23, 1
          %s240 = scalar_select %p239, %s23, 1
          %p241 = scmp.lt.s32.totalorder %s238, 9
          %s242 = scalar_select %p241, %s238, 9
          %s243 = smul.addr %s240, 10
          %s244 = sadd.s32 %s242, %s243
          %s245 = smul.addr %s244, 4
          %s246 = scalar_lea.vmem %s2, %s245
          %s247 = sadd.s32 %s24, 2
        $region36: #{_lambda_.7} parent=23 // pred_fallthru
          _
      $region24: #{_lambda_.7} parent=5 // pred_fallthru
        _
      %p248 = scmp.le.s32.totalorder 1, %s16
      %p249 = scmp.lt.s32.totalorder %s16, 17
      %p250 = pnand %p248, %p249
      %p251 = pneg %p250
      // Predicated region
      $region37: #{_lambda_.7} parent=5 // pred_check
        _
      $region38: #{_lambda_.7} parent=5 // pred_check_branch
        %253 = sbr.rel (%p250) target = $region40
      $region39: #{_lambda_.7} parent=5 // pred_region
        %s254 = ssub.s32 %s16, 1
        %p255 = scmp.lt.s32.totalorder %s25, 1
        %s256 = scalar_select %p255, %s25, 1
        %p257 = scmp.lt.s32.totalorder %s26, 9
        %s258 = scalar_select %p257, %s26, 9
        %s259 = smul.addr %s256, 10
        %s260 = sadd.s32 %s258, %s259
        %s261 = smul.addr %s260, 4
        %s262 = scalar_lea.vmem %s0, %s261
        %p263 = pneg %p56
        %p264 = pneg %p53
        %s265 = sadd.s32 %s26, 1
        %p266 = scmp.lt.s32.totalorder %s25, 1
        %s267 = scalar_select %p266, %s25, 1
        %p268 = scmp.lt.s32.totalorder %s265, 9
        %s269 = scalar_select %p268, %s265, 9
        %s270 = smul.addr %s267, 10
        %s271 = sadd.s32 %s269, %s270
        %s272 = smul.addr %s271, 4
        %s273 = scalar_lea.vmem %s1, %s272
        %p274 = pneg %p86
        %p275 = pneg %p83
        %s276 = sadd.s32 %s26, 2
        %p277 = scmp.lt.s32.totalorder %s25, 1
        %s278 = scalar_select %p277, %s25, 1
        %p279 = scmp.lt.s32.totalorder %s276, 9
        %s280 = scalar_select %p279, %s276, 9
        %s281 = smul.addr %s278, 10
        %s282 = sadd.s32 %s280, %s281
        %s283 = smul.addr %s282, 4
        %s284 = scalar_lea.vmem %s2, %s283
        %p285 = pneg %p116
        %p286 = pneg %p113
        %p287 = pneg %p137
        %p288 = pneg %p134
        %p289 = pneg %p158
        %p290 = pneg %p155
        %p291 = pneg %p186
        %p292 = pneg %p183
        %s293 = sand.u32 %s173, 1
        %s294 = scalar_lea.sflag [#allocation4], %s293
        %s295 = sand.u32 %s173, 1
        %s296 = scalar_lea.vmem [#allocation3], %s295
        %p297 = scmp.lt.s32.totalorder %s25, 1
        %s298 = scalar_select %p297, %s25, 1
        %p299 = scmp.lt.s32.totalorder %s26, 9
        %s300 = scalar_select %p299, %s26, 9
        %s301 = smul.addr %s298, 10
        %s302 = sadd.s32 %s300, %s301
        %s303 = smul.addr %s302, 4
        %s304 = scalar_lea.vmem %s0, %s303
        %s305 = sadd.s32 %s26, 1
        %p306 = scmp.lt.s32.totalorder %s25, 1
        %s307 = scalar_select %p306, %s25, 1
        %p308 = scmp.lt.s32.totalorder %s305, 9
        %s309 = scalar_select %p308, %s305, 9
        %s310 = smul.addr %s307, 10
        %s311 = sadd.s32 %s309, %s310
        %s312 = smul.addr %s311, 4
        %s313 = scalar_lea.vmem %s1, %s312
        %s314 = sadd.s32 %s26, 1
        %s315 = sadd.s32 %s26, 2
        %p316 = scmp.lt.s32.totalorder %s25, 1
        %s317 = scalar_select %p316, %s25, 1
        %p318 = scmp.lt.s32.totalorder %s315, 9
        %s319 = scalar_select %p318, %s315, 9
        %s320 = smul.addr %s317, 10
        %s321 = sadd.s32 %s319, %s320
        %s322 = smul.addr %s321, 4
        %s323 = scalar_lea.vmem %s2, %s322
        %s324 = sadd.s32 %s26, 2
        %v325 = vld [vmem:[%s304] sm:$0xf]
        %v326 = vunpack.c.l.bf16 %v325
        %v327 = vld [vmem:[%s313] sm:$0xf]
        %v328 = vunpack.c.l.bf16 %v327
        %v329 = vld [vmem:[%s323] sm:$0xf]
        %v330 = vunpack.c.l.bf16 %v329
        %v331 = vld [vmem:[%s3] sm:$0xff]
        %333 = vset.pattern.permute.xlu0 0
        %334 = vperm.xlu0 %333, %v331
        %v335 = vpop.permute.xlu0 %334
        %v337 = vmul.f32 %v326, %v335
        %v338 = vadd.f32 %v337, 0.0
        %s339 = scalar_lea.vmem %s3, 8
        %v340 = vld [vmem:[%s339] sm:$0xff]
        %342 = vset.pattern.permute.xlu0 0
        %343 = vperm.xlu0 %342, %v340
        %v344 = vpop.permute.xlu0 %343
        %v346 = vmul.f32 %v326, %v344
        %348 = vrot.lane.b32.xlu0 %v346, 127
        %v349 = vpop.permute.xlu0 %348
        %v351 = vadd.f32 %v338, %v349
        %s352 = scalar_lea.vmem %s3, 16
        %v353 = vld [vmem:[%s352] sm:$0xff]
        %355 = vset.pattern.permute.xlu0 0
        %356 = vperm.xlu0 %355, %v353
        %v357 = vpop.permute.xlu0 %356
        %v359 = vmul.f32 %v326, %v357
        %361 = vrot.lane.b32.xlu0 %v359, 126
        %v362 = vpop.permute.xlu0 %361
        %v364 = vadd.f32 %v351, %v362
        %s365 = scalar_lea.vmem %s3, 24
        %v366 = vld [vmem:[%s365] sm:$0xff]
        %368 = vset.pattern.permute.xlu0 0
        %369 = vperm.xlu0 %368, %v366
        %v370 = vpop.permute.xlu0 %369
        %v372 = vmul.f32 %v328, %v370
        %v373 = vadd.f32 %v364, %v372
        %s374 = scalar_lea.vmem %s3, 32
        %v375 = vld [vmem:[%s374] sm:$0xff]
        %377 = vset.pattern.permute.xlu0 0
        %378 = vperm.xlu0 %377, %v375
        %v379 = vpop.permute.xlu0 %378
        %v381 = vmul.f32 %v328, %v379
        %383 = vrot.lane.b32.xlu0 %v381, 127
        %v384 = vpop.permute.xlu0 %383
        %v386 = vadd.f32 %v373, %v384
        %s387 = scalar_lea.vmem %s3, 40
        %v388 = vld [vmem:[%s387] sm:$0xff]
        %390 = vset.pattern.permute.xlu0 0
        %391 = vperm.xlu0 %390, %v388
        %v392 = vpop.permute.xlu0 %391
        %v394 = vmul.f32 %v328, %v392
        %396 = vrot.lane.b32.xlu0 %v394, 126
        %v397 = vpop.permute.xlu0 %396
        %v399 = vadd.f32 %v386, %v397
        %s400 = scalar_lea.vmem %s3, 48
        %v401 = vld [vmem:[%s400] sm:$0xff]
        %403 = vset.pattern.permute.xlu0 0
        %404 = vperm.xlu0 %403, %v401
        %v405 = vpop.permute.xlu0 %404
        %v407 = vmul.f32 %v330, %v405
        %v408 = vadd.f32 %v399, %v407
        %s409 = scalar_lea.vmem %s3, 56
        %v410 = vld [vmem:[%s409] sm:$0xff]
        %412 = vset.pattern.permute.xlu0 0
        %413 = vperm.xlu0 %412, %v410
        %v414 = vpop.permute.xlu0 %413
        %v416 = vmul.f32 %v330, %v414
        %418 = vrot.lane.b32.xlu0 %v416, 127
        %v419 = vpop.permute.xlu0 %418
        %v421 = vadd.f32 %v408, %v419
        %s422 = scalar_lea.vmem %s3, 64
        %v423 = vld [vmem:[%s422] sm:$0xff]
        %425 = vset.pattern.permute.xlu0 0
        %426 = vperm.xlu0 %425, %v423
        %v427 = vpop.permute.xlu0 %426
        %v429 = vmul.f32 %v330, %v427
        %431 = vrot.lane.b32.xlu0 %v429, 126
        %v432 = vpop.permute.xlu0 %431
        %v434 = vadd.f32 %v421, %v432
        %vm435 = vcmask 64512
        %v436 = vsel %vm435, %v434, 0.0
        %v437 = vrot.slane %v436, 4
        %v438 = vadd.f32 %v436, %v437
        %v439 = vrot.slane %v438, 2
        %v440 = vadd.f32 %v438, %v439
        %v441 = vrot.slane %v440, 1
        %v442 = vadd.f32 %v440, %v441
        %v443 = vld [vmem:[#allocation2] sm:$0x1]
        %445 = vset.pattern.permute.xlu0 0
        %446 = vperm.xlu0 %445, %v443
        %v447 = vpop.permute.xlu0 %446
        %v449 = vlaneseq
        %v450 = vshrl.u32 %v449, 7
        %v451 = vsub.s32 0, %v450
        %v452 = vrot.slane %v447, %v451
        %v453 = vadd.f32 %v442, %v452
        %v454 = vtanh.pop %v453
        %vm455 = vcmask 57344
        %456 = vst.msk [vmem:[%s296] sm:$0x1] %vm455, %v454
        %s457 = sand.u32 %s173, 1
        %s458 = scalar_lea.sflag [#allocation4], %s457
        %s459 = sand.u32 %s173, 1
        %s460 = scalar_lea.vmem [#allocation3], %s459
        // Predicated region
        $region41: #{_lambda_.7} parent=39 // pred_check
          %p461 = pneg %p183
        $region42: #{_lambda_.7} parent=39 // pred_check_branch
          %463 = sbr.rel (%p461) target = $region44
        $region43: #{_lambda_.7} parent=39 // pred_region
          %s465 = ssub.s32 16, 16
          %466 = vsyncadd %s458, %s465
          %s467 = smul.addr %s25, 8
          %s468 = sadd.s32 %s26, %s467
          %s469 = smul.addr %s468, 16
          %s470 = scalar_lea.hbm %s5, %s469
          %s472 = sshll.u32 %s460, 4
          %s473 = int_to_ptr.vmem [resolvable:$true] %s472
          %475 = dma.vmem_to_hbm [thread:$0]  %s473, 16, %s470, %s458
        $region44: #{_lambda_.7} parent=39 // pred_fallthru
          _
      $region40: #{_lambda_.7} parent=5 // pred_fallthru
        _
      %p476 = scmp.le.s32.totalorder 2, %s16
      // Predicated region
      $region45: #{_lambda_.7} parent=5 // pred_check
        %p477 = pneg %p476
      $region46: #{_lambda_.7} parent=5 // pred_check_branch
        %479 = sbr.rel (%p477) target = $region48
      $region47: #{_lambda_.7} parent=5 // pred_region
        %s480 = ssub.s32 %s16, 2
        // Predicated region
        $region49: #{_lambda_.7} parent=47 // pred_check
          %p481 = pneg %p189
        $region50: #{_lambda_.7} parent=47 // pred_check_branch
          %483 = sbr.rel (%p481) target = $region52
        $region51: #{_lambda_.7} parent=47 // pred_region
          %s484 = sand.u32 %s174, 1
          %s485 = scalar_lea.sflag [#allocation4], %s484
          %s486 = sand.u32 %s174, 1
          %s487 = scalar_lea.vmem [#allocation3], %s486
          %488 = dma.done %s485, 16
        $region52: #{_lambda_.7} parent=47 // pred_fallthru
          _
      $region48: #{_lambda_.7} parent=5 // pred_fallthru
        _
    $region6: #{_lambda_.7} parent=1 // loop_footer
      %s20 = sadd.s32 1, %s16
    $region7: #{_lambda_.7} parent=1 // loop_footer_branch
      %15 = sbr.rel target = $region3
    $region8: #{_lambda_.7} parent=1 // loop_exit
      _
    %489 = vsyncpa [#allocation4], 1
    %s490 = scalar_lea.sflag [#allocation4], 1
    %491 = vsyncpa %s490, 1

</llo_original>
